<compile_context>
chip_gen: v7x
topology: tpu7x:2x2x1
jax: 0.10.0
libtpu: 0.0.40
codegen_flags: <defaults>
</compile_context>

<pallas_src>
import jax
import jax.numpy as jnp
from jax.experimental import pallas as pl
from jax.experimental.pallas import tpu as pltpu


def _round_up(x, m):
    return (x + m - 1) // m * m


def ncf_kernel(ug_ref, ig_ref, mlp_ref,
               w0_ref, b0_ref,
               w1_ref, b1_ref,
               w2_ref, b2_ref,
               w3_ref, b3_ref,
               wog_ref, wom_ref, bo_ref,
               out_ref):
    f32 = jnp.float32
    bf16 = jnp.bfloat16

    # GMF branch: elementwise product in f32 (v5e VPU has no bf16).  [TB, E]
    gmf = ug_ref[...].astype(f32) * ig_ref[...].astype(f32)

    # MLP branch.  concat([user_mlp, item_mlp]) was fused into the JAX-side
    # gather, so layer 0 is one lane-aligned MXU matmul: [TB, 2E] @ [2E, L0].
    h = jnp.dot(mlp_ref[...], w0_ref[...], preferred_element_type=f32) + b0_ref[...]
    h = jnp.maximum(h, 0.0)

    for w_ref, b_ref in ((w1_ref, b1_ref), (w2_ref, b2_ref), (w3_ref, b3_ref)):
        h = jnp.dot(h.astype(bf16), w_ref[...], preferred_element_type=f32) + b_ref[...]
        h = jnp.maximum(h, 0.0)
    # Dropout layers are identity in eval mode.

    # Output layer on the VPU: concat([gmf, h]) @ W_out == sum(gmf*wog) + sum(h*wom).
    # (N=1 MXU matmuls would waste 127/128 result lanes; VALU/XLU are idle here.)
    pred = (jnp.sum(gmf * wog_ref[...], axis=-1)
            + jnp.sum(h * wom_ref[...], axis=-1))            # [TB]
    # Lane-dense store: batch on lanes -> unmasked vector stores.
    out_ref[...] = pred.reshape(1, -1) + bo_ref[...]          # [1, TB]


def ncf_forward_pallas(user_indices, item_indices, params, tile_b=1024):
    """Full NCF forward. Embedding gather in JAX, everything else in the kernel."""
    E = params["user_emb_gmf"].shape[1]
    L3 = params["w3"].shape[1]
    B = user_indices.shape[0]

    # ---- batch tiling ----------------------------------------------------
    if B >= tile_b:
        TB = _round_up(tile_b, 128)        # multi-tile: lane-dense output tiles need %128
    else:
        TB = max(_round_up(B, 8), 8)       # single tile covering the (padded) batch
    Bp = _round_up(B, TB)
    if Bp != B:
        pad = Bp - B
        user_indices = jnp.concatenate(
            [user_indices, jnp.zeros((pad,), user_indices.dtype)])
        item_indices = jnp.concatenate(
            [item_indices, jnp.zeros((pad,), item_indices.dtype)])

    # ---- embedding gathers (bf16 tables) — glue in plain JAX --------------
    ug = jnp.take(params["user_emb_gmf"], user_indices, axis=0)      # [Bp, E]  bf16
    ig = jnp.take(params["item_emb_gmf"], item_indices, axis=0)      # [Bp, E]  bf16
    mlp_in = jnp.concatenate(                                        # [Bp, 2E] bf16
        [jnp.take(params["user_emb_mlp"], user_indices, axis=0),
         jnp.take(params["item_emb_mlp"], item_indices, axis=0)], axis=1)

    # ---- output projection as row vectors for the in-kernel VPU reduce ----
    wout = params["w_out"].astype(jnp.float32)          # [E + L3, 1]
    wog = wout[:E, 0].reshape(1, E)
    wom = wout[E:, 0].reshape(1, L3)

    args = (ug, ig, mlp_in,
            params["w0"], params["b0"],
            params["w1"], params["b1"],
            params["w2"], params["b2"],
            params["w3"], params["b3"],
            wog, wom, params["b_out"])

    def act_spec(x):     # batch-tiled activations: pipelined HBM->VMEM DMA per tile
        return pl.BlockSpec((TB, x.shape[1]), lambda i: (i, 0))

    def const_spec(x):   # weights/biases: full block, constant index -> stays resident
        return pl.BlockSpec(x.shape, lambda i: (0, 0))

    in_specs = [act_spec(a) for a in args[:3]] + [const_spec(a) for a in args[3:]]

    out = pl.pallas_call(
        ncf_kernel,
        grid=(Bp // TB,),
        out_shape=jax.ShapeDtypeStruct((1, Bp), jnp.float32),
        in_specs=in_specs,
        out_specs=pl.BlockSpec((1, TB), lambda i: (0, i)),
        compiler_params=pltpu.CompilerParams(
            dimension_semantics=("parallel",)),   # v7x: shard batch tiles across 2 TCs
    )(*args)

    return out[0, :B]  # matches prediction.squeeze()


def init_params(key, num_users, num_items, embedding_dim=32, layers=(64, 32, 16, 8)):
    """Deterministic init matching PyTorch _init_weights (normal std=0.01, bias=0).

    Embedding tables and MLP weights stored in bf16 (HBM-traffic / MXU-rate win);
    biases and the tiny output projection stay f32.
    """
    keys = jax.random.split(key, 16)
    std = 0.01
    E = embedding_dim
    L = list(layers)
    bf16, f32 = jnp.bfloat16, jnp.float32
    p = {
        "user_emb_gmf": (std * jax.random.normal(keys[0], (num_users, E), f32)).astype(bf16),
        "item_emb_gmf": (std * jax.random.normal(keys[1], (num_items, E), f32)).astype(bf16),
        "user_emb_mlp": (std * jax.random.normal(keys[2], (num_users, E), f32)).astype(bf16),
        "item_emb_mlp": (std * jax.random.normal(keys[3], (num_items, E), f32)).astype(bf16),
        # Linear weights stored as [in, out] (transpose of torch's [out, in]).
        "w0": (std * jax.random.normal(keys[4], (2 * E, L[0]), f32)).astype(bf16),
        "b0": jnp.zeros((1, L[0]), f32),
        "w1": (std * jax.random.normal(keys[5], (L[0], L[1]), f32)).astype(bf16),
        "b1": jnp.zeros((1, L[1]), f32),
        "w2": (std * jax.random.normal(keys[6], (L[1], L[2]), f32)).astype(bf16),
        "b2": jnp.zeros((1, L[2]), f32),
        "w3": (std * jax.random.normal(keys[7], (L[2], L[3]), f32)).astype(bf16),
        "b3": jnp.zeros((1, L[3]), f32),
        "w_out": std * jax.random.normal(keys[8], (E + L[3], 1), f32),
        "b_out": jnp.zeros((1, 1), f32),
    }
    return p


def ncf_forward_ref(user_indices, item_indices, params):
    """Pure-JAX f32 reference (eval-mode dropout = identity) for correctness check."""
    f32 = jnp.float32
    ug = jnp.take(params["user_emb_gmf"], user_indices, axis=0).astype(f32)
    ig = jnp.take(params["item_emb_gmf"], item_indices, axis=0).astype(f32)
    um = jnp.take(params["user_emb_mlp"], user_indices, axis=0).astype(f32)
    im = jnp.take(params["item_emb_mlp"], item_indices, axis=0).astype(f32)
    gmf = ug * ig
    h = jnp.concatenate([um, im], axis=1)
    for wk, bk in (("w0", "b0"), ("w1", "b1"), ("w2", "b2"), ("w3", "b3")):
        h = jnp.maximum(h @ params[wk].astype(f32) + params[bk], 0.0)
    cat = jnp.concatenate([gmf, h], axis=1)
    return (cat @ params["w_out"] + params["b_out"]).reshape(-1)


if __name__ == "__main__":
    key = jax.random.PRNGKey(0)
    num_users, num_items = 50, 100
    embedding_dim = 32
    layers = (64, 32, 16, 8)
    batch = 300   # small, but exercises a multi-tile grid (+ padding) with tile_b=128

    k_params, k_u, k_i = jax.random.split(key, 3)
    params = init_params(k_params, num_users, num_items, embedding_dim, layers)

    user_indices = jax.random.randint(k_u, (batch,), 0, num_users, dtype=jnp.int32)
    item_indices = jax.random.randint(k_i, (batch,), 0, num_items, dtype=jnp.int32)

    out = ncf_forward_pallas(user_indices, item_indices, params, tile_b=128)
    out = jax.block_until_ready(out)

    ref = ncf_forward_ref(user_indices, item_indices, params)
    assert out.shape == (batch,)
    # bf16 intermediate casts in the kernel vs f32 reference -> relaxed tolerance.
    assert jnp.allclose(out, ref, atol=1e-7, rtol=2e-2), (out, ref)

    print("KERNEL_OK")
</pallas_src>

<mosaic_0001>
module attributes {stable_mosaic.version = 11 : i64} {
  func.func @ncf_kernel(%arg0: i32, %arg1: memref<128x32xbf16, #tpu.memory_space<vmem>>, %arg2: memref<128x32xbf16, #tpu.memory_space<vmem>>, %arg3: memref<128x64xbf16, #tpu.memory_space<vmem>>, %arg4: memref<64x64xbf16, #tpu.memory_space<vmem>>, %arg5: memref<1x64xf32, #tpu.memory_space<vmem>>, %arg6: memref<64x32xbf16, #tpu.memory_space<vmem>>, %arg7: memref<1x32xf32, #tpu.memory_space<vmem>>, %arg8: memref<32x16xbf16, #tpu.memory_space<vmem>>, %arg9: memref<1x16xf32, #tpu.memory_space<vmem>>, %arg10: memref<16x8xbf16, #tpu.memory_space<vmem>>, %arg11: memref<1x8xf32, #tpu.memory_space<vmem>>, %arg12: memref<1x32xf32, #tpu.memory_space<vmem>>, %arg13: memref<1x8xf32, #tpu.memory_space<vmem>>, %arg14: memref<1x1xf32, #tpu.memory_space<vmem>>, %arg15: memref<1x128xf32, #tpu.memory_space<vmem>>) attributes {dimension_semantics = [#tpu.dimension_semantics<parallel>], iteration_bounds = array<i64: 3>, scalar_prefetch = 0 : i64, scratch_operands = 0 : i64, tpu.core_type = #tpu.core_type<tc>, window_params = [{transform_indices = @transform_0, window_bounds = array<i64: 128, 32>}, {transform_indices = @transform_1, window_bounds = array<i64: 128, 32>}, {transform_indices = @transform_2, window_bounds = array<i64: 128, 64>}, {pipeline_mode = #tpu.pipeline_mode<synchronous>, transform_indices = @transform_3, window_bounds = array<i64: 64, 64>}, {pipeline_mode = #tpu.pipeline_mode<synchronous>, transform_indices = @transform_4, window_bounds = array<i64: 1, 64>}, {pipeline_mode = #tpu.pipeline_mode<synchronous>, transform_indices = @transform_5, window_bounds = array<i64: 64, 32>}, {pipeline_mode = #tpu.pipeline_mode<synchronous>, transform_indices = @transform_6, window_bounds = array<i64: 1, 32>}, {pipeline_mode = #tpu.pipeline_mode<synchronous>, transform_indices = @transform_7, window_bounds = array<i64: 32, 16>}, {pipeline_mode = #tpu.pipeline_mode<synchronous>, transform_indices = @transform_8, window_bounds = array<i64: 1, 16>}, {pipeline_mode = #tpu.pipeline_mode<synchronous>, transform_indices = @transform_9, window_bounds = array<i64: 16, 8>}, {pipeline_mode = #tpu.pipeline_mode<synchronous>, transform_indices = @transform_10, window_bounds = array<i64: 1, 8>}, {pipeline_mode = #tpu.pipeline_mode<synchronous>, transform_indices = @transform_11, window_bounds = array<i64: 1, 32>}, {pipeline_mode = #tpu.pipeline_mode<synchronous>, transform_indices = @transform_12, window_bounds = array<i64: 1, 8>}, {pipeline_mode = #tpu.pipeline_mode<synchronous>, transform_indices = @transform_13, window_bounds = array<i64: 1, 1>}, {transform_indices = @transform_14, window_bounds = array<i64: 1, 128>}]} {
    %c0 = arith.constant 0 : index
    %c0_0 = arith.constant 0 : index
    %0 = vector.load %arg1[%c0, %c0_0] : memref<128x32xbf16, #tpu.memory_space<vmem>>, vector<128x32xbf16>
    %1 = arith.extf %0 : vector<128x32xbf16> to vector<128x32xf32>
    %c0_1 = arith.constant 0 : index
    %c0_2 = arith.constant 0 : index
    %2 = vector.load %arg2[%c0_1, %c0_2] : memref<128x32xbf16, #tpu.memory_space<vmem>>, vector<128x32xbf16>
    %3 = arith.extf %2 : vector<128x32xbf16> to vector<128x32xf32>
    %4 = arith.mulf %1, %3 : vector<128x32xf32>
    %c0_3 = arith.constant 0 : index
    %c0_4 = arith.constant 0 : index
    %5 = vector.load %arg3[%c0_3, %c0_4] : memref<128x64xbf16, #tpu.memory_space<vmem>>, vector<128x64xbf16>
    %c0_5 = arith.constant 0 : index
    %c0_6 = arith.constant 0 : index
    %6 = vector.load %arg4[%c0_5, %c0_6] : memref<64x64xbf16, #tpu.memory_space<vmem>>, vector<64x64xbf16>
    %cst = arith.constant dense<0.000000e+00> : vector<128x64xf32>
    %7 = tpu.matmul %5, %6, %cst {dimension_numbers = #tpu.dot_dimension_numbers<[1], [0], [0], [1], [0, 0, 1, 1], [], []>} : vector<128x64xbf16>, vector<64x64xbf16>, vector<128x64xf32> -> vector<128x64xf32>
    %c0_7 = arith.constant 0 : index
    %c0_8 = arith.constant 0 : index
    %8 = vector.load %arg5[%c0_7, %c0_8] : memref<1x64xf32, #tpu.memory_space<vmem>>, vector<1x64xf32>
    %9 = vector.broadcast %8 : vector<1x64xf32> to vector<128x64xf32>
    %10 = arith.addf %7, %9 : vector<128x64xf32>
    %cst_9 = arith.constant 0.000000e+00 : f32
    %11 = vector.broadcast %cst_9 : f32 to vector<128x64xf32>
    %12 = arith.maximumf %10, %11 : vector<128x64xf32>
    %13 = arith.truncf %12 : vector<128x64xf32> to vector<128x64xbf16>
    %c0_10 = arith.constant 0 : index
    %c0_11 = arith.constant 0 : index
    %14 = vector.load %arg6[%c0_10, %c0_11] : memref<64x32xbf16, #tpu.memory_space<vmem>>, vector<64x32xbf16>
    %cst_12 = arith.constant dense<0.000000e+00> : vector<128x32xf32>
    %15 = tpu.matmul %13, %14, %cst_12 {dimension_numbers = #tpu.dot_dimension_numbers<[1], [0], [0], [1], [0, 0, 1, 1], [], []>} : vector<128x64xbf16>, vector<64x32xbf16>, vector<128x32xf32> -> vector<128x32xf32>
    %c0_13 = arith.constant 0 : index
    %c0_14 = arith.constant 0 : index
    %16 = vector.load %arg7[%c0_13, %c0_14] : memref<1x32xf32, #tpu.memory_space<vmem>>, vector<1x32xf32>
    %17 = vector.broadcast %16 : vector<1x32xf32> to vector<128x32xf32>
    %18 = arith.addf %15, %17 : vector<128x32xf32>
    %cst_15 = arith.constant 0.000000e+00 : f32
    %19 = vector.broadcast %cst_15 : f32 to vector<128x32xf32>
    %20 = arith.maximumf %18, %19 : vector<128x32xf32>
    %21 = arith.truncf %20 : vector<128x32xf32> to vector<128x32xbf16>
    %c0_16 = arith.constant 0 : index
    %c0_17 = arith.constant 0 : index
    %22 = vector.load %arg8[%c0_16, %c0_17] : memref<32x16xbf16, #tpu.memory_space<vmem>>, vector<32x16xbf16>
    %cst_18 = arith.constant dense<0.000000e+00> : vector<128x16xf32>
    %23 = tpu.matmul %21, %22, %cst_18 {dimension_numbers = #tpu.dot_dimension_numbers<[1], [0], [0], [1], [0, 0, 1, 1], [], []>} : vector<128x32xbf16>, vector<32x16xbf16>, vector<128x16xf32> -> vector<128x16xf32>
    %c0_19 = arith.constant 0 : index
    %c0_20 = arith.constant 0 : index
    %24 = vector.load %arg9[%c0_19, %c0_20] : memref<1x16xf32, #tpu.memory_space<vmem>>, vector<1x16xf32>
    %25 = vector.broadcast %24 : vector<1x16xf32> to vector<128x16xf32>
    %26 = arith.addf %23, %25 : vector<128x16xf32>
    %cst_21 = arith.constant 0.000000e+00 : f32
    %27 = vector.broadcast %cst_21 : f32 to vector<128x16xf32>
    %28 = arith.maximumf %26, %27 : vector<128x16xf32>
    %29 = arith.truncf %28 : vector<128x16xf32> to vector<128x16xbf16>
    %c0_22 = arith.constant 0 : index
    %c0_23 = arith.constant 0 : index
    %30 = vector.load %arg10[%c0_22, %c0_23] : memref<16x8xbf16, #tpu.memory_space<vmem>>, vector<16x8xbf16>
    %cst_24 = arith.constant dense<0.000000e+00> : vector<128x8xf32>
    %31 = tpu.matmul %29, %30, %cst_24 {dimension_numbers = #tpu.dot_dimension_numbers<[1], [0], [0], [1], [0, 0, 1, 1], [], []>} : vector<128x16xbf16>, vector<16x8xbf16>, vector<128x8xf32> -> vector<128x8xf32>
    %c0_25 = arith.constant 0 : index
    %c0_26 = arith.constant 0 : index
    %32 = vector.load %arg11[%c0_25, %c0_26] : memref<1x8xf32, #tpu.memory_space<vmem>>, vector<1x8xf32>
    %33 = vector.broadcast %32 : vector<1x8xf32> to vector<128x8xf32>
    %34 = arith.addf %31, %33 : vector<128x8xf32>
    %cst_27 = arith.constant 0.000000e+00 : f32
    %35 = vector.broadcast %cst_27 : f32 to vector<128x8xf32>
    %36 = arith.maximumf %34, %35 : vector<128x8xf32>
    %c0_28 = arith.constant 0 : index
    %c0_29 = arith.constant 0 : index
    %37 = vector.load %arg12[%c0_28, %c0_29] : memref<1x32xf32, #tpu.memory_space<vmem>>, vector<1x32xf32>
    %38 = vector.broadcast %37 : vector<1x32xf32> to vector<128x32xf32>
    %39 = arith.mulf %4, %38 : vector<128x32xf32>
    %cst_30 = arith.constant dense<0.000000e+00> : vector<128xf32>
    %40 = vector.multi_reduction <add>, %39, %cst_30 [1] : vector<128x32xf32> to vector<128xf32>
    %c0_31 = arith.constant 0 : index
    %c0_32 = arith.constant 0 : index
    %41 = vector.load %arg13[%c0_31, %c0_32] : memref<1x8xf32, #tpu.memory_space<vmem>>, vector<1x8xf32>
    %42 = vector.broadcast %41 : vector<1x8xf32> to vector<128x8xf32>
    %43 = arith.mulf %36, %42 : vector<128x8xf32>
    %cst_33 = arith.constant dense<0.000000e+00> : vector<128xf32>
    %44 = vector.multi_reduction <add>, %43, %cst_33 [1] : vector<128x8xf32> to vector<128xf32>
    %45 = arith.addf %40, %44 : vector<128xf32>
    %46 = vector.shape_cast %45 : vector<128xf32> to vector<1x128xf32>
    %c0_34 = arith.constant 0 : index
    %c0_35 = arith.constant 0 : index
    %47 = vector.load %arg14[%c0_34, %c0_35] : memref<1x1xf32, #tpu.memory_space<vmem>>, vector<1x1xf32>
    %48 = vector.broadcast %47 : vector<1x1xf32> to vector<1x128xf32>
    %49 = arith.addf %46, %48 : vector<1x128xf32>
    %c0_36 = arith.constant 0 : index
    %c0_37 = arith.constant 0 : index
    %50 = vector.load %arg15[%c0_36, %c0_37] : memref<1x128xf32, #tpu.memory_space<vmem>>, vector<1x128xf32>
    tpu.vector_store %arg15[%c0_36, %c0_37], %49 {strides = array<i32>} : memref<1x128xf32, #tpu.memory_space<vmem>>, vector<1x128xf32>,
    return
  }
  func.func @transform_0(%arg0: i32) -> (i32, i32) {
    %c0_i32 = arith.constant 0 : i32
    %c0_i32_0 = arith.constant 0 : i32
    return %arg0, %c0_i32 : i32, i32
  }
  func.func @transform_1(%arg0: i32) -> (i32, i32) {
    %c0_i32 = arith.constant 0 : i32
    %c0_i32_0 = arith.constant 0 : i32
    return %arg0, %c0_i32 : i32, i32
  }
  func.func @transform_2(%arg0: i32) -> (i32, i32) {
    %c0_i32 = arith.constant 0 : i32
    %c0_i32_0 = arith.constant 0 : i32
    return %arg0, %c0_i32 : i32, i32
  }
  func.func @transform_3(%arg0: i32) -> (i32, i32) {
    %c0_i32 = arith.constant 0 : i32
    %c0_i32_0 = arith.constant 0 : i32
    %c0_i32_1 = arith.constant 0 : i32
    return %c0_i32, %c0_i32_0 : i32, i32
  }
  func.func @transform_4(%arg0: i32) -> (i32, i32) {
    %c0_i32 = arith.constant 0 : i32
    %c0_i32_0 = arith.constant 0 : i32
    %c0_i32_1 = arith.constant 0 : i32
    return %c0_i32, %c0_i32_0 : i32, i32
  }
  func.func @transform_5(%arg0: i32) -> (i32, i32) {
    %c0_i32 = arith.constant 0 : i32
    %c0_i32_0 = arith.constant 0 : i32
    %c0_i32_1 = arith.constant 0 : i32
    return %c0_i32, %c0_i32_0 : i32, i32
  }
  func.func @transform_6(%arg0: i32) -> (i32, i32) {
    %c0_i32 = arith.constant 0 : i32
    %c0_i32_0 = arith.constant 0 : i32
    %c0_i32_1 = arith.constant 0 : i32
    return %c0_i32, %c0_i32_0 : i32, i32
  }
  func.func @transform_7(%arg0: i32) -> (i32, i32) {
    %c0_i32 = arith.constant 0 : i32
    %c0_i32_0 = arith.constant 0 : i32
    %c0_i32_1 = arith.constant 0 : i32
    return %c0_i32, %c0_i32_0 : i32, i32
  }
  func.func @transform_8(%arg0: i32) -> (i32, i32) {
    %c0_i32 = arith.constant 0 : i32
    %c0_i32_0 = arith.constant 0 : i32
    %c0_i32_1 = arith.constant 0 : i32
    return %c0_i32, %c0_i32_0 : i32, i32
  }
  func.func @transform_9(%arg0: i32) -> (i32, i32) {
    %c0_i32 = arith.constant 0 : i32
    %c0_i32_0 = arith.constant 0 : i32
    %c0_i32_1 = arith.constant 0 : i32
    return %c0_i32, %c0_i32_0 : i32, i32
  }
  func.func @transform_10(%arg0: i32) -> (i32, i32) {
    %c0_i32 = arith.constant 0 : i32
    %c0_i32_0 = arith.constant 0 : i32
    %c0_i32_1 = arith.constant 0 : i32
    return %c0_i32, %c0_i32_0 : i32, i32
  }
  func.func @transform_11(%arg0: i32) -> (i32, i32) {
    %c0_i32 = arith.constant 0 : i32
    %c0_i32_0 = arith.constant 0 : i32
    %c0_i32_1 = arith.constant 0 : i32
    return %c0_i32, %c0_i32_0 : i32, i32
  }
  func.func @transform_12(%arg0: i32) -> (i32, i32) {
    %c0_i32 = arith.constant 0 : i32
    %c0_i32_0 = arith.constant 0 : i32
    %c0_i32_1 = arith.constant 0 : i32
    return %c0_i32, %c0_i32_0 : i32, i32
  }
  func.func @transform_13(%arg0: i32) -> (i32, i32) {
    %c0_i32 = arith.constant 0 : i32
    %c0_i32_0 = arith.constant 0 : i32
    %c0_i32_1 = arith.constant 0 : i32
    return %c0_i32, %c0_i32_0 : i32, i32
  }
  func.func @transform_14(%arg0: i32) -> (i32, i32) {
    %c0_i32 = arith.constant 0 : i32
    %c0_i32_0 = arith.constant 0 : i32
    return %c0_i32, %arg0 : i32, i32
  }
}

</mosaic_0001>

<llo_original>
// kernel: tpu_custom_call.1
$region0: #{tpu_custom_call.1}
  #allocation0 [shape = 'u32[]', space=smem, size = 0x4, offset = 0x4, fixed_abs, tag = 'smem constant byte address 0x4 - core index']
  #allocation1 [shape = 'u32[144,128]{1,0:T(1,128)}', space=vmem, size = 0x12000, scoped, tag = 'internal scratch']
  #allocation2 [shape = 'f32[1,1]{1,0:T(1,128)S(1)}', space=vmem, size = 0x200, scoped, tag = 'scoped memory for tpu_custom_call.1']
  %s0 = inlined_call_operand.vmem [shape: bf16[384,32], index: 0, kind: input, shape index: {}]
  %s1 = inlined_call_operand.vmem [shape: bf16[384,32], index: 1, kind: input, shape index: {}]
  %s2 = inlined_call_operand.vmem [shape: bf16[384,64], index: 2, kind: input, shape index: {}]
  %s3 = inlined_call_operand.vmem [shape: bf16[64,64], index: 3, kind: input, shape index: {}]
  %s4 = inlined_call_operand.vmem [shape: f32[1,64], index: 4, kind: input, shape index: {}]
  %s5 = inlined_call_operand.vmem [shape: bf16[64,32], index: 5, kind: input, shape index: {}]
  %s6 = inlined_call_operand.vmem [shape: f32[1,32], index: 6, kind: input, shape index: {}]
  %s7 = inlined_call_operand.vmem [shape: bf16[32,16], index: 7, kind: input, shape index: {}]
  %s8 = inlined_call_operand.vmem [shape: f32[1,16], index: 8, kind: input, shape index: {}]
  %s9 = inlined_call_operand.vmem [shape: bf16[16,8], index: 9, kind: input, shape index: {}]
  %s10 = inlined_call_operand.vmem [shape: f32[1,8], index: 10, kind: input, shape index: {}]
  %s11 = inlined_call_operand.vmem [shape: f32[1,32], index: 11, kind: input, shape index: {}]
  %s12 = inlined_call_operand.vmem [shape: f32[1,8], index: 12, kind: input, shape index: {}]
  %s13 = inlined_call_operand.<no memory space> [shape: f32[1,1], index: 13, kind: input, shape index: {}]
  %s14 = inlined_call_operand.hbm [shape: f32[1,384], index: 14, kind: output, shape index: {}]
  %s15 = sld [smem:[#allocation0]]
  $region89: #{tpu_custom_call.1} parent=0
    _
  %s17 = ssub.s32 1, %s15
  %s18 = scalar_select 0, %s17, %s15
  %v19 = vstv %s13
  %20 = vst [vmem:[#allocation2] sm:$0x1] %v19
  $region1: #{tpu_custom_call.1} parent=0
    #allocation3 [shape = 'u8[1024]{0}', space=vmem, size = 0x400, scoped, tag = 'output window, operand 0']
    #allocation4 [shape = 's32[2]{0}', space=sflag, size = 0x8, scoped, tag = 'scoped memory for tpu_custom_call.1']
    %21 = vsyncpa [#allocation4], 0
    %s22 = scalar_lea.sflag [#allocation4], 1
    %23 = vsyncpa %s22, 0
    loop: start=0, step=1, limit=5
    $region2: #{tpu_custom_call.1} parent=1 // loop_pre_header
      _
    $region3: #{tpu_custom_call.1} parent=1 // loop_header
      %s25 = sphi 0, %s29
      %p26 = scmp.ge.s32.totalorder %s25, 5
      %s35 = sphi 0, %s37
      %s38 = sphi 0, %s35
      %s39 = sphi 0, %s38
      %s55 = sphi 0, %s39
      %s61 = sphi 0, %s63
      %s64 = sphi 0, %s61
      %s65 = sphi 0, %s64
      %s81 = sphi 0, %s65
      %s87 = sphi 0, %s89
      %s90 = sphi 0, %s87
      %s91 = sphi 0, %s90
      %s107 = sphi 0, %s91
      %s111 = sphi 0, %s111
      %s113 = sphi 0, %s111
      %s114 = sphi 0, %s113
      %s128 = sphi 0, %s114
      %s132 = sphi 0, %s132
      %s134 = sphi 0, %s132
      %s135 = sphi 0, %s134
      %s149 = sphi 0, %s135
      %s153 = sphi 0, %s153
      %s155 = sphi 0, %s153
      %s156 = sphi 0, %s155
      %s170 = sphi 0, %s156
      %s174 = sphi 0, %s174
      %s176 = sphi 0, %s174
      %s177 = sphi 0, %s176
      %s191 = sphi 0, %s177
      %s195 = sphi 0, %s195
      %s197 = sphi 0, %s195
      %s198 = sphi 0, %s197
      %s212 = sphi 0, %s198
      %s216 = sphi 0, %s216
      %s218 = sphi 0, %s216
      %s219 = sphi 0, %s218
      %s233 = sphi 0, %s219
      %s237 = sphi 0, %s237
      %s239 = sphi 0, %s237
      %s240 = sphi 0, %s239
      %s254 = sphi 0, %s240
      %s258 = sphi 0, %s258
      %s260 = sphi 0, %s258
      %s261 = sphi 0, %s260
      %s275 = sphi 0, %s261
      %s279 = sphi 0, %s279
      %s281 = sphi 0, %s279
      %s282 = sphi 0, %s281
      %s296 = sphi 0, %s282
      %s300 = sphi 0, %s300
      %s302 = sphi 0, %s300
      %s303 = sphi 0, %s302
      %s317 = sphi 0, %s303
      %s321 = sphi 0, %s321
      %s323 = sphi 0, %s321
      %s324 = sphi 0, %s323
      %s338 = sphi 0, %s324
      %s344 = sphi 0, %s346
      %s347 = sphi 0, %s344
      %s348 = sphi 0, %s347
      %s364 = sphi 0, %s348
    $region4: #{tpu_custom_call.1} parent=1 // loop_header_branch
      %28 = sbr.rel (%p26) target = $region8
    $region5: #{tpu_custom_call.1} parent=1 // loop_body
      %s30 = ssub.s32 %s25, 1
      %s31 = ssub.s32 %s25, 2
      %s32 = sadd.s32 %s25, 1
      %s33 = ssub.s32 %s25, %s32
      %p34 = scmp.eq.s32.totalorder %s33, 0
      %s36 = sadd.s32 %s35, 1
      %s37 = scalar_select %p34, %s35, %s36
      %p40 = pneg %p34
      %p41 = scmp.eq.s32.totalorder %s25, 2
      %p42 = por %p40, %p41
      %p43 = scmp.ne.s32.totalorder %s35, %s38
      %p44 = scmp.eq.s32.totalorder %s25, 0
      %p45 = por %p43, %p44
      %p46 = scmp.ne.s32.totalorder %s35, %s38
      %p47 = scmp.eq.s32.totalorder %s30, 2
      %p48 = por %p46, %p47
      %p49 = scmp.ne.s32.totalorder %s38, %s39
      %p50 = scmp.eq.s32.totalorder %s30, 0
      %p51 = por %p49, %p50
      %p52 = scmp.ne.s32.totalorder %s38, %s39
      %p53 = scmp.eq.s32.totalorder %s31, 2
      %p54 = por %p52, %p53
      %p56 = scmp.ne.s32.totalorder %s39, %s55
      %p57 = scmp.eq.s32.totalorder %s31, 0
      %p58 = por %p56, %p57
      %s59 = ssub.s32 %s25, %s32
      %p60 = scmp.eq.s32.totalorder %s59, 0
      %s62 = sadd.s32 %s61, 1
      %s63 = scalar_select %p60, %s61, %s62
      %p66 = pneg %p60
      %p67 = scmp.eq.s32.totalorder %s25, 2
      %p68 = por %p66, %p67
      %p69 = scmp.ne.s32.totalorder %s61, %s64
      %p70 = scmp.eq.s32.totalorder %s25, 0
      %p71 = por %p69, %p70
      %p72 = scmp.ne.s32.totalorder %s61, %s64
      %p73 = scmp.eq.s32.totalorder %s30, 2
      %p74 = por %p72, %p73
      %p75 = scmp.ne.s32.totalorder %s64, %s65
      %p76 = scmp.eq.s32.totalorder %s30, 0
      %p77 = por %p75, %p76
      %p78 = scmp.ne.s32.totalorder %s64, %s65
      %p79 = scmp.eq.s32.totalorder %s31, 2
      %p80 = por %p78, %p79
      %p82 = scmp.ne.s32.totalorder %s65, %s81
      %p83 = scmp.eq.s32.totalorder %s31, 0
      %p84 = por %p82, %p83
      %s85 = ssub.s32 %s25, %s32
      %p86 = scmp.eq.s32.totalorder %s85, 0
      %s88 = sadd.s32 %s87, 1
      %s89 = scalar_select %p86, %s87, %s88
      %p92 = pneg %p86
      %p93 = scmp.eq.s32.totalorder %s25, 2
      %p94 = por %p92, %p93
      %p95 = scmp.ne.s32.totalorder %s87, %s90
      %p96 = scmp.eq.s32.totalorder %s25, 0
      %p97 = por %p95, %p96
      %p98 = scmp.ne.s32.totalorder %s87, %s90
      %p99 = scmp.eq.s32.totalorder %s30, 2
      %p100 = por %p98, %p99
      %p101 = scmp.ne.s32.totalorder %s90, %s91
      %p102 = scmp.eq.s32.totalorder %s30, 0
      %p103 = por %p101, %p102
      %p104 = scmp.ne.s32.totalorder %s90, %s91
      %p105 = scmp.eq.s32.totalorder %s31, 2
      %p106 = por %p104, %p105
      %p108 = scmp.ne.s32.totalorder %s91, %s107
      %p109 = scmp.eq.s32.totalorder %s31, 0
      %p110 = por %p108, %p109
      %s112 = sadd.s32 %s111, 1
      %p115 = scmp.eq.s32.totalorder %s25, 2
      %p116 = scmp.ne.s32.totalorder %s111, %s113
      %p117 = scmp.eq.s32.totalorder %s25, 0
      %p118 = por %p116, %p117
      %p119 = scmp.ne.s32.totalorder %s111, %s113
      %p120 = scmp.eq.s32.totalorder %s30, 2
      %p121 = por %p119, %p120
      %p122 = scmp.ne.s32.totalorder %s113, %s114
      %p123 = scmp.eq.s32.totalorder %s30, 0
      %p124 = por %p122, %p123
      %p125 = scmp.ne.s32.totalorder %s113, %s114
      %p126 = scmp.eq.s32.totalorder %s31, 2
      %p127 = por %p125, %p126
      %p129 = scmp.ne.s32.totalorder %s114, %s128
      %p130 = scmp.eq.s32.totalorder %s31, 0
      %p131 = por %p129, %p130
      %s133 = sadd.s32 %s132, 1
      %p136 = scmp.eq.s32.totalorder %s25, 2
      %p137 = scmp.ne.s32.totalorder %s132, %s134
      %p138 = scmp.eq.s32.totalorder %s25, 0
      %p139 = por %p137, %p138
      %p140 = scmp.ne.s32.totalorder %s132, %s134
      %p141 = scmp.eq.s32.totalorder %s30, 2
      %p142 = por %p140, %p141
      %p143 = scmp.ne.s32.totalorder %s134, %s135
      %p144 = scmp.eq.s32.totalorder %s30, 0
      %p145 = por %p143, %p144
      %p146 = scmp.ne.s32.totalorder %s134, %s135
      %p147 = scmp.eq.s32.totalorder %s31, 2
      %p148 = por %p146, %p147
      %p150 = scmp.ne.s32.totalorder %s135, %s149
      %p151 = scmp.eq.s32.totalorder %s31, 0
      %p152 = por %p150, %p151
      %s154 = sadd.s32 %s153, 1
      %p157 = scmp.eq.s32.totalorder %s25, 2
      %p158 = scmp.ne.s32.totalorder %s153, %s155
      %p159 = scmp.eq.s32.totalorder %s25, 0
      %p160 = por %p158, %p159
      %p161 = scmp.ne.s32.totalorder %s153, %s155
      %p162 = scmp.eq.s32.totalorder %s30, 2
      %p163 = por %p161, %p162
      %p164 = scmp.ne.s32.totalorder %s155, %s156
      %p165 = scmp.eq.s32.totalorder %s30, 0
      %p166 = por %p164, %p165
      %p167 = scmp.ne.s32.totalorder %s155, %s156
      %p168 = scmp.eq.s32.totalorder %s31, 2
      %p169 = por %p167, %p168
      %p171 = scmp.ne.s32.totalorder %s156, %s170
      %p172 = scmp.eq.s32.totalorder %s31, 0
      %p173 = por %p171, %p172
      %s175 = sadd.s32 %s174, 1
      %p178 = scmp.eq.s32.totalorder %s25, 2
      %p179 = scmp.ne.s32.totalorder %s174, %s176
      %p180 = scmp.eq.s32.totalorder %s25, 0
      %p181 = por %p179, %p180
      %p182 = scmp.ne.s32.totalorder %s174, %s176
      %p183 = scmp.eq.s32.totalorder %s30, 2
      %p184 = por %p182, %p183
      %p185 = scmp.ne.s32.totalorder %s176, %s177
      %p186 = scmp.eq.s32.totalorder %s30, 0
      %p187 = por %p185, %p186
      %p188 = scmp.ne.s32.totalorder %s176, %s177
      %p189 = scmp.eq.s32.totalorder %s31, 2
      %p190 = por %p188, %p189
      %p192 = scmp.ne.s32.totalorder %s177, %s191
      %p193 = scmp.eq.s32.totalorder %s31, 0
      %p194 = por %p192, %p193
      %s196 = sadd.s32 %s195, 1
      %p199 = scmp.eq.s32.totalorder %s25, 2
      %p200 = scmp.ne.s32.totalorder %s195, %s197
      %p201 = scmp.eq.s32.totalorder %s25, 0
      %p202 = por %p200, %p201
      %p203 = scmp.ne.s32.totalorder %s195, %s197
      %p204 = scmp.eq.s32.totalorder %s30, 2
      %p205 = por %p203, %p204
      %p206 = scmp.ne.s32.totalorder %s197, %s198
      %p207 = scmp.eq.s32.totalorder %s30, 0
      %p208 = por %p206, %p207
      %p209 = scmp.ne.s32.totalorder %s197, %s198
      %p210 = scmp.eq.s32.totalorder %s31, 2
      %p211 = por %p209, %p210
      %p213 = scmp.ne.s32.totalorder %s198, %s212
      %p214 = scmp.eq.s32.totalorder %s31, 0
      %p215 = por %p213, %p214
      %s217 = sadd.s32 %s216, 1
      %p220 = scmp.eq.s32.totalorder %s25, 2
      %p221 = scmp.ne.s32.totalorder %s216, %s218
      %p222 = scmp.eq.s32.totalorder %s25, 0
      %p223 = por %p221, %p222
      %p224 = scmp.ne.s32.totalorder %s216, %s218
      %p225 = scmp.eq.s32.totalorder %s30, 2
      %p226 = por %p224, %p225
      %p227 = scmp.ne.s32.totalorder %s218, %s219
      %p228 = scmp.eq.s32.totalorder %s30, 0
      %p229 = por %p227, %p228
      %p230 = scmp.ne.s32.totalorder %s218, %s219
      %p231 = scmp.eq.s32.totalorder %s31, 2
      %p232 = por %p230, %p231
      %p234 = scmp.ne.s32.totalorder %s219, %s233
      %p235 = scmp.eq.s32.totalorder %s31, 0
      %p236 = por %p234, %p235
      %s238 = sadd.s32 %s237, 1
      %p241 = scmp.eq.s32.totalorder %s25, 2
      %p242 = scmp.ne.s32.totalorder %s237, %s239
      %p243 = scmp.eq.s32.totalorder %s25, 0
      %p244 = por %p242, %p243
      %p245 = scmp.ne.s32.totalorder %s237, %s239
      %p246 = scmp.eq.s32.totalorder %s30, 2
      %p247 = por %p245, %p246
      %p248 = scmp.ne.s32.totalorder %s239, %s240
      %p249 = scmp.eq.s32.totalorder %s30, 0
      %p250 = por %p248, %p249
      %p251 = scmp.ne.s32.totalorder %s239, %s240
      %p252 = scmp.eq.s32.totalorder %s31, 2
      %p253 = por %p251, %p252
      %p255 = scmp.ne.s32.totalorder %s240, %s254
      %p256 = scmp.eq.s32.totalorder %s31, 0
      %p257 = por %p255, %p256
      %s259 = sadd.s32 %s258, 1
      %p262 = scmp.eq.s32.totalorder %s25, 2
      %p263 = scmp.ne.s32.totalorder %s258, %s260
      %p264 = scmp.eq.s32.totalorder %s25, 0
      %p265 = por %p263, %p264
      %p266 = scmp.ne.s32.totalorder %s258, %s260
      %p267 = scmp.eq.s32.totalorder %s30, 2
      %p268 = por %p266, %p267
      %p269 = scmp.ne.s32.totalorder %s260, %s261
      %p270 = scmp.eq.s32.totalorder %s30, 0
      %p271 = por %p269, %p270
      %p272 = scmp.ne.s32.totalorder %s260, %s261
      %p273 = scmp.eq.s32.totalorder %s31, 2
      %p274 = por %p272, %p273
      %p276 = scmp.ne.s32.totalorder %s261, %s275
      %p277 = scmp.eq.s32.totalorder %s31, 0
      %p278 = por %p276, %p277
      %s280 = sadd.s32 %s279, 1
      %p283 = scmp.eq.s32.totalorder %s25, 2
      %p284 = scmp.ne.s32.totalorder %s279, %s281
      %p285 = scmp.eq.s32.totalorder %s25, 0
      %p286 = por %p284, %p285
      %p287 = scmp.ne.s32.totalorder %s279, %s281
      %p288 = scmp.eq.s32.totalorder %s30, 2
      %p289 = por %p287, %p288
      %p290 = scmp.ne.s32.totalorder %s281, %s282
      %p291 = scmp.eq.s32.totalorder %s30, 0
      %p292 = por %p290, %p291
      %p293 = scmp.ne.s32.totalorder %s281, %s282
      %p294 = scmp.eq.s32.totalorder %s31, 2
      %p295 = por %p293, %p294
      %p297 = scmp.ne.s32.totalorder %s282, %s296
      %p298 = scmp.eq.s32.totalorder %s31, 0
      %p299 = por %p297, %p298
      %s301 = sadd.s32 %s300, 1
      %p304 = scmp.eq.s32.totalorder %s25, 2
      %p305 = scmp.ne.s32.totalorder %s300, %s302
      %p306 = scmp.eq.s32.totalorder %s25, 0
      %p307 = por %p305, %p306
      %p308 = scmp.ne.s32.totalorder %s300, %s302
      %p309 = scmp.eq.s32.totalorder %s30, 2
      %p310 = por %p308, %p309
      %p311 = scmp.ne.s32.totalorder %s302, %s303
      %p312 = scmp.eq.s32.totalorder %s30, 0
      %p313 = por %p311, %p312
      %p314 = scmp.ne.s32.totalorder %s302, %s303
      %p315 = scmp.eq.s32.totalorder %s31, 2
      %p316 = por %p314, %p315
      %p318 = scmp.ne.s32.totalorder %s303, %s317
      %p319 = scmp.eq.s32.totalorder %s31, 0
      %p320 = por %p318, %p319
      %s322 = sadd.s32 %s321, 1
      %p325 = scmp.eq.s32.totalorder %s25, 2
      %p326 = scmp.ne.s32.totalorder %s321, %s323
      %p327 = scmp.eq.s32.totalorder %s25, 0
      %p328 = por %p326, %p327
      %p329 = scmp.ne.s32.totalorder %s321, %s323
      %p330 = scmp.eq.s32.totalorder %s30, 2
      %p331 = por %p329, %p330
      %p332 = scmp.ne.s32.totalorder %s323, %s324
      %p333 = scmp.eq.s32.totalorder %s30, 0
      %p334 = por %p332, %p333
      %p335 = scmp.ne.s32.totalorder %s323, %s324
      %p336 = scmp.eq.s32.totalorder %s31, 2
      %p337 = por %p335, %p336
      %p339 = scmp.ne.s32.totalorder %s324, %s338
      %p340 = scmp.eq.s32.totalorder %s31, 0
      %p341 = por %p339, %p340
      %s342 = ssub.s32 %s25, %s32
      %p343 = scmp.eq.s32.totalorder %s342, 0
      %s345 = sadd.s32 %s344, 1
      %s346 = scalar_select %p343, %s344, %s345
      %p349 = pneg %p343
      %p350 = scmp.eq.s32.totalorder %s25, 2
      %p351 = por %p349, %p350
      %p352 = scmp.ne.s32.totalorder %s344, %s347
      %p353 = scmp.eq.s32.totalorder %s25, 0
      %p354 = por %p352, %p353
      %p355 = scmp.ne.s32.totalorder %s344, %s347
      %p356 = scmp.eq.s32.totalorder %s30, 2
      %p357 = por %p355, %p356
      %p358 = scmp.ne.s32.totalorder %s347, %s348
      %p359 = scmp.eq.s32.totalorder %s30, 0
      %p360 = por %p358, %p359
      %p361 = scmp.ne.s32.totalorder %s347, %s348
      %p362 = scmp.eq.s32.totalorder %s31, 2
      %p363 = por %p361, %p362
      %p365 = scmp.ne.s32.totalorder %s348, %s364
      %p366 = scmp.eq.s32.totalorder %s31, 0
      %p367 = por %p365, %p366
      %p368 = scmp.le.s32.totalorder 1, %s25
      %p369 = scmp.lt.s32.totalorder %s25, 4
      %p370 = pnand %p368, %p369
      %p371 = pneg %p370
      // Predicated region
      $region9: #{tpu_custom_call.1} parent=5 // pred_check
        _
      $region10: #{tpu_custom_call.1} parent=5 // pred_check_branch
        %373 = sbr.rel (%p370) target = $region12
      $region11: #{tpu_custom_call.1} parent=5 // pred_region
        %s374 = ssub.s32 %s25, 1
        // Predicated region
        $region13: #{tpu_custom_call.1} parent=11 // pred_check
          %p375 = pneg %p124
        $region14: #{tpu_custom_call.1} parent=11 // pred_check_branch
          %377 = sbr.rel (%p375) target = $region16
        $region15: #{tpu_custom_call.1} parent=11 // pred_region
          _
        $region16: #{tpu_custom_call.1} parent=11 // pred_fallthru
          _
        // Predicated region
        $region17: #{tpu_custom_call.1} parent=11 // pred_check
          %p378 = pneg %p145
        $region18: #{tpu_custom_call.1} parent=11 // pred_check_branch
          %380 = sbr.rel (%p378) target = $region20
        $region19: #{tpu_custom_call.1} parent=11 // pred_region
          _
        $region20: #{tpu_custom_call.1} parent=11 // pred_fallthru
          _
        // Predicated region
        $region21: #{tpu_custom_call.1} parent=11 // pred_check
          %p381 = pneg %p166
        $region22: #{tpu_custom_call.1} parent=11 // pred_check_branch
          %383 = sbr.rel (%p381) target = $region24
        $region23: #{tpu_custom_call.1} parent=11 // pred_region
          _
        $region24: #{tpu_custom_call.1} parent=11 // pred_fallthru
          _
        // Predicated region
        $region25: #{tpu_custom_call.1} parent=11 // pred_check
          %p384 = pneg %p187
        $region26: #{tpu_custom_call.1} parent=11 // pred_check_branch
          %386 = sbr.rel (%p384) target = $region28
        $region27: #{tpu_custom_call.1} parent=11 // pred_region
          _
        $region28: #{tpu_custom_call.1} parent=11 // pred_fallthru
          _
        // Predicated region
        $region29: #{tpu_custom_call.1} parent=11 // pred_check
          %p387 = pneg %p208
        $region30: #{tpu_custom_call.1} parent=11 // pred_check_branch
          %389 = sbr.rel (%p387) target = $region32
        $region31: #{tpu_custom_call.1} parent=11 // pred_region
          _
        $region32: #{tpu_custom_call.1} parent=11 // pred_fallthru
          _
        // Predicated region
        $region33: #{tpu_custom_call.1} parent=11 // pred_check
          %p390 = pneg %p229
        $region34: #{tpu_custom_call.1} parent=11 // pred_check_branch
          %392 = sbr.rel (%p390) target = $region36
        $region35: #{tpu_custom_call.1} parent=11 // pred_region
          _
        $region36: #{tpu_custom_call.1} parent=11 // pred_fallthru
          _
        // Predicated region
        $region37: #{tpu_custom_call.1} parent=11 // pred_check
          %p393 = pneg %p250
        $region38: #{tpu_custom_call.1} parent=11 // pred_check_branch
          %395 = sbr.rel (%p393) target = $region40
        $region39: #{tpu_custom_call.1} parent=11 // pred_region
          _
        $region40: #{tpu_custom_call.1} parent=11 // pred_fallthru
          _
        // Predicated region
        $region41: #{tpu_custom_call.1} parent=11 // pred_check
          %p396 = pneg %p271
        $region42: #{tpu_custom_call.1} parent=11 // pred_check_branch
          %398 = sbr.rel (%p396) target = $region44
        $region43: #{tpu_custom_call.1} parent=11 // pred_region
          _
        $region44: #{tpu_custom_call.1} parent=11 // pred_fallthru
          _
        // Predicated region
        $region45: #{tpu_custom_call.1} parent=11 // pred_check
          %p399 = pneg %p292
        $region46: #{tpu_custom_call.1} parent=11 // pred_check_branch
          %401 = sbr.rel (%p399) target = $region48
        $region47: #{tpu_custom_call.1} parent=11 // pred_region
          _
        $region48: #{tpu_custom_call.1} parent=11 // pred_fallthru
          _
        // Predicated region
        $region49: #{tpu_custom_call.1} parent=11 // pred_check
          %p402 = pneg %p313
        $region50: #{tpu_custom_call.1} parent=11 // pred_check_branch
          %404 = sbr.rel (%p402) target = $region52
        $region51: #{tpu_custom_call.1} parent=11 // pred_region
          _
        $region52: #{tpu_custom_call.1} parent=11 // pred_fallthru
          _
        // Predicated region
        $region53: #{tpu_custom_call.1} parent=11 // pred_check
          %p405 = pneg %p334
        $region54: #{tpu_custom_call.1} parent=11 // pred_check_branch
          %407 = sbr.rel (%p405) target = $region56
        $region55: #{tpu_custom_call.1} parent=11 // pred_region
          _
        $region56: #{tpu_custom_call.1} parent=11 // pred_fallthru
          _
      $region12: #{tpu_custom_call.1} parent=5 // pred_fallthru
        _
      %p408 = scmp.lt.s32.totalorder %s25, 3
      // Predicated region
      $region57: #{tpu_custom_call.1} parent=5 // pred_check
        %p409 = pneg %p408
      $region58: #{tpu_custom_call.1} parent=5 // pred_check_branch
        %411 = sbr.rel (%p409) target = $region60
      $region59: #{tpu_custom_call.1} parent=5 // pred_region
        // Predicated region
        $region61: #{tpu_custom_call.1} parent=59 // pred_check
          %p412 = pneg %p45
        $region62: #{tpu_custom_call.1} parent=59 // pred_check_branch
          %414 = sbr.rel (%p412) target = $region64
        $region63: #{tpu_custom_call.1} parent=59 // pred_region
          %s415 = smul.u32 16, %s25
          %p416 = scmp.lt.s32.totalorder %s415, 47
          %s417 = scalar_select %p416, %s415, 47
          %s418 = smul.addr %s417, 4
          %s419 = scalar_lea.vmem %s0, %s418
          %s420 = smul.u32 16, %s25
        $region64: #{tpu_custom_call.1} parent=59 // pred_fallthru
          _
        // Predicated region
        $region65: #{tpu_custom_call.1} parent=59 // pred_check
          %p421 = pneg %p71
        $region66: #{tpu_custom_call.1} parent=59 // pred_check_branch
          %423 = sbr.rel (%p421) target = $region68
        $region67: #{tpu_custom_call.1} parent=59 // pred_region
          %s424 = smul.u32 16, %s25
          %p425 = scmp.lt.s32.totalorder %s424, 47
          %s426 = scalar_select %p425, %s424, 47
          %s427 = smul.addr %s426, 4
          %s428 = scalar_lea.vmem %s1, %s427
          %s429 = smul.u32 16, %s25
        $region68: #{tpu_custom_call.1} parent=59 // pred_fallthru
          _
        // Predicated region
        $region69: #{tpu_custom_call.1} parent=59 // pred_check
          %p430 = pneg %p97
        $region70: #{tpu_custom_call.1} parent=59 // pred_check_branch
          %432 = sbr.rel (%p430) target = $region72
        $region71: #{tpu_custom_call.1} parent=59 // pred_region
          %s433 = smul.u32 16, %s25
          %p434 = scmp.lt.s32.totalorder %s433, 47
          %s435 = scalar_select %p434, %s433, 47
          %s436 = smul.addr %s435, 4
          %s437 = scalar_lea.vmem %s2, %s436
          %s438 = smul.u32 16, %s25
        $region72: #{tpu_custom_call.1} parent=59 // pred_fallthru
          _
      $region60: #{tpu_custom_call.1} parent=5 // pred_fallthru
        _
      %p439 = scmp.le.s32.totalorder 1, %s25
      %p440 = scmp.lt.s32.totalorder %s25, 4
      %p441 = pnand %p439, %p440
      %p442 = pneg %p441
      // Predicated region
      $region73: #{tpu_custom_call.1} parent=5 // pred_check
        _
      $region74: #{tpu_custom_call.1} parent=5 // pred_check_branch
        %444 = sbr.rel (%p441) target = $region76
      $region75: #{tpu_custom_call.1} parent=5 // pred_region
        %s445 = ssub.s32 %s25, 1
        %s446 = smul.u32 16, %s30
        %p447 = scmp.lt.s32.totalorder %s446, 47
        %s448 = scalar_select %p447, %s446, 47
        %s449 = smul.addr %s448, 4
        %s450 = scalar_lea.vmem %s0, %s449
        %p451 = pneg %p51
        %p452 = pneg %p48
        %s453 = smul.u32 16, %s30
        %p454 = scmp.lt.s32.totalorder %s453, 47
        %s455 = scalar_select %p454, %s453, 47
        %s456 = smul.addr %s455, 4
        %s457 = scalar_lea.vmem %s1, %s456
        %p458 = pneg %p77
        %p459 = pneg %p74
        %s460 = smul.u32 16, %s30
        %p461 = scmp.lt.s32.totalorder %s460, 47
        %s462 = scalar_select %p461, %s460, 47
        %s463 = smul.addr %s462, 4
        %s464 = scalar_lea.vmem %s2, %s463
        %p465 = pneg %p103
        %p466 = pneg %p100
        %p467 = pneg %p124
        %p468 = pneg %p121
        %p469 = pneg %p145
        %p470 = pneg %p142
        %p471 = pneg %p166
        %p472 = pneg %p163
        %p473 = pneg %p187
        %p474 = pneg %p184
        %p475 = pneg %p208
        %p476 = pneg %p205
        %p477 = pneg %p229
        %p478 = pneg %p226
        %p479 = pneg %p250
        %p480 = pneg %p247
        %p481 = pneg %p271
        %p482 = pneg %p268
        %p483 = pneg %p292
        %p484 = pneg %p289
        %p485 = pneg %p313
        %p486 = pneg %p310
        %p487 = pneg %p334
        %p488 = pneg %p331
        %p489 = pneg %p360
        %p490 = pneg %p357
        %s491 = sand.u32 %s347, 1
        %s492 = scalar_lea.sflag [#allocation4], %s491
        %s493 = sand.u32 %s347, 1
        %s494 = scalar_lea.vmem [#allocation3], %s493
        %s495 = smul.u32 16, %s30
        %p496 = scmp.lt.s32.totalorder %s495, 47
        %s497 = scalar_select %p496, %s495, 47
        %s498 = smul.addr %s497, 4
        %s499 = scalar_lea.vmem %s0, %s498
        %s500 = smul.u32 16, %s30
        %s501 = smul.u32 16, %s30
        %p502 = scmp.lt.s32.totalorder %s501, 47
        %s503 = scalar_select %p502, %s501, 47
        %s504 = smul.addr %s503, 4
        %s505 = scalar_lea.vmem %s1, %s504
        %s506 = smul.u32 16, %s30
        %s507 = smul.u32 16, %s30
        %p508 = scmp.lt.s32.totalorder %s507, 47
        %s509 = scalar_select %p508, %s507, 47
        %s510 = smul.addr %s509, 4
        %s511 = scalar_lea.vmem %s2, %s510
        %s512 = smul.u32 16, %s30
        %v514 = vld [vmem:[%s499] sm:$0xf]
        %v515 = vld [vmem:[%s499 + $0x4] sm:$0xf]
        %v516 = vld [vmem:[%s499 + $0x8] sm:$0xf]
        %v517 = vld [vmem:[%s499 + $0xc] sm:$0xf]
        %v518 = vld [vmem:[%s499 + $0x10] sm:$0xf]
        %v519 = vld [vmem:[%s499 + $0x14] sm:$0xf]
        %v520 = vld [vmem:[%s499 + $0x18] sm:$0xf]
        %v521 = vld [vmem:[%s499 + $0x1c] sm:$0xf]
        %v522 = vld [vmem:[%s499 + $0x20] sm:$0xf]
        %v523 = vld [vmem:[%s499 + $0x24] sm:$0xf]
        %v524 = vld [vmem:[%s499 + $0x28] sm:$0xf]
        %v525 = vld [vmem:[%s499 + $0x2c] sm:$0xf]
        %v526 = vld [vmem:[%s499 + $0x30] sm:$0xf]
        %v527 = vld [vmem:[%s499 + $0x34] sm:$0xf]
        %v528 = vld [vmem:[%s499 + $0x38] sm:$0xf]
        %v529 = vld [vmem:[%s499 + $0x3c] sm:$0xf]
        %v530 = vunpack.c.l.bf16 %v514
        %v531 = vunpack.c.l.bf16 %v515
        %v532 = vunpack.c.l.bf16 %v516
        %v533 = vunpack.c.l.bf16 %v517
        %v534 = vunpack.c.l.bf16 %v518
        %v535 = vunpack.c.l.bf16 %v519
        %v536 = vunpack.c.l.bf16 %v520
        %v537 = vunpack.c.l.bf16 %v521
        %v538 = vunpack.c.l.bf16 %v522
        %v539 = vunpack.c.l.bf16 %v523
        %v540 = vunpack.c.l.bf16 %v524
        %v541 = vunpack.c.l.bf16 %v525
        %v542 = vunpack.c.l.bf16 %v526
        %v543 = vunpack.c.l.bf16 %v527
        %v544 = vunpack.c.l.bf16 %v528
        %v545 = vunpack.c.l.bf16 %v529
        %v546 = vld [vmem:[%s505] sm:$0xf]
        %v547 = vld [vmem:[%s505 + $0x4] sm:$0xf]
        %v548 = vld [vmem:[%s505 + $0x8] sm:$0xf]
        %v549 = vld [vmem:[%s505 + $0xc] sm:$0xf]
        %v550 = vld [vmem:[%s505 + $0x10] sm:$0xf]
        %v551 = vld [vmem:[%s505 + $0x14] sm:$0xf]
        %v552 = vld [vmem:[%s505 + $0x18] sm:$0xf]
        %v553 = vld [vmem:[%s505 + $0x1c] sm:$0xf]
        %v554 = vld [vmem:[%s505 + $0x20] sm:$0xf]
        %v555 = vld [vmem:[%s505 + $0x24] sm:$0xf]
        %v556 = vld [vmem:[%s505 + $0x28] sm:$0xf]
        %v557 = vld [vmem:[%s505 + $0x2c] sm:$0xf]
        %v558 = vld [vmem:[%s505 + $0x30] sm:$0xf]
        %v559 = vld [vmem:[%s505 + $0x34] sm:$0xf]
        %v560 = vld [vmem:[%s505 + $0x38] sm:$0xf]
        %v561 = vld [vmem:[%s505 + $0x3c] sm:$0xf]
        %v562 = vunpack.c.l.bf16 %v546
        %v563 = vunpack.c.l.bf16 %v547
        %v564 = vunpack.c.l.bf16 %v548
        %v565 = vunpack.c.l.bf16 %v549
        %v566 = vunpack.c.l.bf16 %v550
        %v567 = vunpack.c.l.bf16 %v551
        %v568 = vunpack.c.l.bf16 %v552
        %v569 = vunpack.c.l.bf16 %v553
        %v570 = vunpack.c.l.bf16 %v554
        %v571 = vunpack.c.l.bf16 %v555
        %v572 = vunpack.c.l.bf16 %v556
        %v573 = vunpack.c.l.bf16 %v557
        %v574 = vunpack.c.l.bf16 %v558
        %v575 = vunpack.c.l.bf16 %v559
        %v576 = vunpack.c.l.bf16 %v560
        %v577 = vunpack.c.l.bf16 %v561
        %v578 = vmul.f32 %v530, %v562
        %v579 = vmul.f32 %v531, %v563
        %v580 = vmul.f32 %v532, %v564
        %v581 = vmul.f32 %v533, %v565
        %v582 = vmul.f32 %v534, %v566
        %v583 = vmul.f32 %v535, %v567
        %v584 = vmul.f32 %v536, %v568
        %v585 = vmul.f32 %v537, %v569
        %v586 = vmul.f32 %v538, %v570
        %v587 = vmul.f32 %v539, %v571
        %v588 = vmul.f32 %v540, %v572
        %v589 = vmul.f32 %v541, %v573
        %v590 = vmul.f32 %v542, %v574
        %v591 = vmul.f32 %v543, %v575
        %v592 = vmul.f32 %v544, %v576
        %v593 = vmul.f32 %v545, %v577
        %v594 = vld [vmem:[%s511] sm:$0xf]
        %v595 = vld [vmem:[%s511 + $0x4] sm:$0xf]
        %v596 = vld [vmem:[%s511 + $0x8] sm:$0xf]
        %v597 = vld [vmem:[%s511 + $0xc] sm:$0xf]
        %v598 = vld [vmem:[%s511 + $0x10] sm:$0xf]
        %v599 = vld [vmem:[%s511 + $0x14] sm:$0xf]
        %v600 = vld [vmem:[%s511 + $0x18] sm:$0xf]
        %v601 = vld [vmem:[%s511 + $0x1c] sm:$0xf]
        %v602 = vld [vmem:[%s511 + $0x20] sm:$0xf]
        %v603 = vld [vmem:[%s511 + $0x24] sm:$0xf]
        %v604 = vld [vmem:[%s511 + $0x28] sm:$0xf]
        %v605 = vld [vmem:[%s511 + $0x2c] sm:$0xf]
        %v606 = vld [vmem:[%s511 + $0x30] sm:$0xf]
        %v607 = vld [vmem:[%s511 + $0x34] sm:$0xf]
        %v608 = vld [vmem:[%s511 + $0x38] sm:$0xf]
        %v609 = vld [vmem:[%s511 + $0x3c] sm:$0xf]
        %v610 = vld [vmem:[%s3] sm:$0xf]
        %v611 = vld [vmem:[%s3 + $0x4] sm:$0xf]
        %v612 = vld [vmem:[%s3 + $0x8] sm:$0xf]
        %v613 = vld [vmem:[%s3 + $0xc] sm:$0xf]
        %v614 = vld [vmem:[%s3 + $0x10] sm:$0xf]
        %v615 = vld [vmem:[%s3 + $0x14] sm:$0xf]
        %v616 = vld [vmem:[%s3 + $0x18] sm:$0xf]
        %v617 = vld [vmem:[%s3 + $0x1c] sm:$0xf]
        %v618 = vld [vmem:[%s4] sm:$0x1]
        %v620 = vlaneseq
        %v621 = vshrl.u32 %v620, 7
        %v622 = vsub.s32 0, %v621
        %v623 = vrot.slane %v618, %v622
        %v641 = vunpack.c.l.b16 %v594
        %v642 = vunpack.c.l.b16 %v595
        %v643 = vunpack.c.l.b16 %v596
        %v644 = vunpack.c.l.b16 %v597
        %v645 = vunpack.c.l.b16 %v598
        %v646 = vunpack.c.l.b16 %v599
        %v647 = vunpack.c.l.b16 %v600
        %v648 = vunpack.c.l.b16 %v601
        %v649 = vunpack.c.l.b16 %v602
        %v650 = vunpack.c.l.b16 %v603
        %v651 = vunpack.c.l.b16 %v604
        %v652 = vunpack.c.l.b16 %v605
        %v653 = vunpack.c.l.b16 %v606
        %v654 = vunpack.c.l.b16 %v607
        %v655 = vunpack.c.l.b16 %v608
        %v656 = vunpack.c.l.b16 %v609
        %v657 = vpack.c.b16 %v642, %v641
        %v658 = vpack.c.b16 %v644, %v643
        %v659 = vpack.c.b16 %v646, %v645
        %v660 = vpack.c.b16 %v648, %v647
        %v661 = vpack.c.b16 %v650, %v649
        %v662 = vpack.c.b16 %v652, %v651
        %v663 = vpack.c.b16 %v654, %v653
        %v664 = vpack.c.b16 %v656, %v655
        %v673 = vunpack.c.l.b16 %v610
        %v674 = vunpack.c.l.b16 %v611
        %v675 = vunpack.c.l.b16 %v612
        %v676 = vunpack.c.l.b16 %v613
        %v677 = vunpack.c.l.b16 %v614
        %v678 = vunpack.c.l.b16 %v615
        %v679 = vunpack.c.l.b16 %v616
        %v680 = vunpack.c.l.b16 %v617
        %v681 = vpack.c.b16 %v674, %v673
        %v682 = vpack.c.b16 %v676, %v675
        %v683 = vpack.c.b16 %v678, %v677
        %v684 = vpack.c.b16 %v680, %v679
        %vm689 = vcmask 523264
        %v691 = vsel %vm689, %v657, 0
        %v694 = vsel %vm689, %v658, 0
        %v697 = vsel %vm689, %v659, 0
        %v700 = vsel %vm689, %v660, 0
        %v703 = vsel %vm689, %v661, 0
        %v706 = vsel %vm689, %v662, 0
        %v709 = vsel %vm689, %v663, 0
        %v712 = vsel %vm689, %v664, 0
        %714 = vmatprep.subr.bf16.mxu0 0
        %715 = vmatpush1.bf16.msra.mxu0 %v681
        %716 = vmatprep.subr.bf16.mxu0 0
        %717 = vmatpush1.bf16.msra.mxu0 %v682
        %718 = vmatprep.subr.bf16.mxu0 0
        %719 = vmatpush1.bf16.msra.mxu0 %v683
        %720 = vmatprep.subr.bf16.mxu0 0
        %721 = vmatpush1.bf16.msra.mxu0 %v684
        %722 = vmatprep.subr.bf16.mxu0 0
        %723 = vmatpush1.bf16.msra.mxu0 0
        %724 = vmatprep.subr.bf16.mxu0 0
        %725 = vmatpush1.bf16.msra.mxu0 0
        %726 = vmatprep.subr.bf16.mxu0 0
        %727 = vmatpush1.bf16.msra.mxu0 0
        %728 = vmatprep.subr.bf16.mxu0 0
        %729 = vmatpush1.bf16.msra.mxu0 0
        %730 = vmatprep.subr.bf16.mxu0 0
        %731 = vmatpush1.bf16.msra.mxu0 0
        %732 = vmatprep.subr.bf16.mxu0 0
        %733 = vmatpush1.bf16.msra.mxu0 0
        %734 = vmatprep.subr.bf16.mxu0 0
        %735 = vmatpush1.bf16.msra.mxu0 0
        %736 = vmatprep.subr.bf16.mxu0 0
        %737 = vmatpush1.bf16.msra.mxu0 0
        %738 = vmatprep.subr.bf16.mxu0 0
        %739 = vmatpush1.bf16.msra.mxu0 0
        %740 = vmatprep.subr.bf16.mxu0 0
        %741 = vmatpush1.bf16.msra.mxu0 0
        %742 = vmatprep.subr.bf16.mxu0 0
        %743 = vmatpush1.bf16.msra.mxu0 0
        %744 = vmatprep.subr.bf16.mxu0 0
        %745 = vmatpush1.bf16.msra.mxu0 0
        %746 = vmatprep.mubr.bf16.mxu0 0
        %747 = vmatmul.mubr.bf16.gmra.mrb[0].mxu0 %v691
        %v748 = vpop.f32.mrb[0].mxu0
        %v749 = vadd.f32 %v623, %v748
        %v750 = vpop.f32.mrb[0].mxu0
        %v751 = vpop.f32.mrb[0].mxu0
        %v752 = vadd.f32 %v623, %v751
        %v753 = vpop.f32.mrb[0].mxu0
        %754 = vmatprep.mubr.bf16.mxu0 0
        %755 = vmatmul.mubr.bf16.gmra.mrb[0].mxu0 %v694
        %v756 = vpop.f32.mrb[0].mxu0
        %v757 = vadd.f32 %v623, %v756
        %v758 = vpop.f32.mrb[0].mxu0
        %v759 = vpop.f32.mrb[0].mxu0
        %v760 = vadd.f32 %v623, %v759
        %v761 = vpop.f32.mrb[0].mxu0
        %762 = vmatprep.mubr.bf16.mxu0 0
        %763 = vmatmul.mubr.bf16.gmra.mrb[0].mxu0 %v697
        %v764 = vpop.f32.mrb[0].mxu0
        %v765 = vadd.f32 %v623, %v764
        %v766 = vpop.f32.mrb[0].mxu0
        %v767 = vpop.f32.mrb[0].mxu0
        %v768 = vadd.f32 %v623, %v767
        %v769 = vpop.f32.mrb[0].mxu0
        %770 = vmatprep.mubr.bf16.mxu0 0
        %771 = vmatmul.mubr.bf16.gmra.mrb[0].mxu0 %v700
        %v772 = vpop.f32.mrb[0].mxu0
        %v773 = vadd.f32 %v623, %v772
        %v774 = vpop.f32.mrb[0].mxu0
        %v775 = vpop.f32.mrb[0].mxu0
        %v776 = vadd.f32 %v623, %v775
        %v777 = vpop.f32.mrb[0].mxu0
        %778 = vmatprep.mubr.bf16.mxu0 0
        %779 = vmatmul.mubr.bf16.gmra.mrb[0].mxu0 %v703
        %v780 = vpop.f32.mrb[0].mxu0
        %v781 = vadd.f32 %v623, %v780
        %v782 = vpop.f32.mrb[0].mxu0
        %v783 = vpop.f32.mrb[0].mxu0
        %v784 = vadd.f32 %v623, %v783
        %v785 = vpop.f32.mrb[0].mxu0
        %786 = vmatprep.mubr.bf16.mxu0 0
        %787 = vmatmul.mubr.bf16.gmra.mrb[0].mxu0 %v706
        %v788 = vpop.f32.mrb[0].mxu0
        %v789 = vadd.f32 %v623, %v788
        %v790 = vpop.f32.mrb[0].mxu0
        %v791 = vpop.f32.mrb[0].mxu0
        %v792 = vadd.f32 %v623, %v791
        %v793 = vpop.f32.mrb[0].mxu0
        %794 = vmatprep.mubr.bf16.mxu0 0
        %795 = vmatmul.mubr.bf16.gmra.mrb[0].mxu0 %v709
        %v796 = vpop.f32.mrb[0].mxu0
        %v797 = vadd.f32 %v623, %v796
        %v798 = vpop.f32.mrb[0].mxu0
        %v799 = vpop.f32.mrb[0].mxu0
        %v800 = vadd.f32 %v623, %v799
        %v801 = vpop.f32.mrb[0].mxu0
        %802 = vmatprep.mubr.bf16.mxu0 0
        %803 = vmatmul.mubr.bf16.gmra.mrb[0].mxu0 %v712
        %v804 = vpop.f32.mrb[0].mxu0
        %v805 = vadd.f32 %v623, %v804
        %v806 = vpop.f32.mrb[0].mxu0
        %v807 = vpop.f32.mrb[0].mxu0
        %v808 = vadd.f32 %v623, %v807
        %v809 = vpop.f32.mrb[0].mxu0
        %810 = vdwg.mxu0
        %v811 = vmax.f32 %v749, 0.0
        %v812 = vmax.f32 %v752, 0.0
        %v813 = vmax.f32 %v757, 0.0
        %v814 = vmax.f32 %v760, 0.0
        %v815 = vmax.f32 %v765, 0.0
        %v816 = vmax.f32 %v768, 0.0
        %v817 = vmax.f32 %v773, 0.0
        %v818 = vmax.f32 %v776, 0.0
        %v819 = vmax.f32 %v781, 0.0
        %v820 = vmax.f32 %v784, 0.0
        %v821 = vmax.f32 %v789, 0.0
        %v822 = vmax.f32 %v792, 0.0
        %v823 = vmax.f32 %v797, 0.0
        %v824 = vmax.f32 %v800, 0.0
        %v825 = vmax.f32 %v805, 0.0
        %v826 = vmax.f32 %v808, 0.0
        %v827 = vpack.c.bf16 %v812, %v811
        %v828 = vpack.c.bf16 %v814, %v813
        %v829 = vpack.c.bf16 %v816, %v815
        %v830 = vpack.c.bf16 %v818, %v817
        %v831 = vpack.c.bf16 %v820, %v819
        %v832 = vpack.c.bf16 %v822, %v821
        %v833 = vpack.c.bf16 %v824, %v823
        %v834 = vpack.c.bf16 %v826, %v825
        %v835 = vld [vmem:[%s5] sm:$0xf]
        %v836 = vld [vmem:[%s5 + $0x4] sm:$0xf]
        %v837 = vld [vmem:[%s5 + $0x8] sm:$0xf]
        %v838 = vld [vmem:[%s5 + $0xc] sm:$0xf]
        %v839 = vld [vmem:[%s5 + $0x10] sm:$0xf]
        %v840 = vld [vmem:[%s5 + $0x14] sm:$0xf]
        %v841 = vld [vmem:[%s5 + $0x18] sm:$0xf]
        %v842 = vld [vmem:[%s5 + $0x1c] sm:$0xf]
        %v843 = vld [vmem:[%s6] sm:$0x1]
        %v845 = vlaneseq
        %v846 = vshrl.u32 %v845, 7
        %v847 = vsub.s32 0, %v846
        %v848 = vrot.slane %v843, %v847
        %v858 = vunpack.c.l.b16 %v835
        %v859 = vunpack.c.l.b16 %v836
        %v860 = vunpack.c.l.b16 %v837
        %v861 = vunpack.c.l.b16 %v838
        %v862 = vunpack.c.l.b16 %v839
        %v863 = vunpack.c.l.b16 %v840
        %v864 = vunpack.c.l.b16 %v841
        %v865 = vunpack.c.l.b16 %v842
        %v866 = vpack.c.b16 %v859, %v858
        %v867 = vpack.c.b16 %v861, %v860
        %v868 = vpack.c.b16 %v863, %v862
        %v869 = vpack.c.b16 %v865, %v864
        %v875 = vsel %vm689, %v827, 0
        %v878 = vsel %vm689, %v828, 0
        %v881 = vsel %vm689, %v829, 0
        %v884 = vsel %vm689, %v830, 0
        %v887 = vsel %vm689, %v831, 0
        %v890 = vsel %vm689, %v832, 0
        %v893 = vsel %vm689, %v833, 0
        %v896 = vsel %vm689, %v834, 0
        %898 = vmatprep.subr.bf16.mxu0 0
        %899 = vmatpush1.bf16.msra.mxu0 %v866
        %900 = vmatprep.subr.bf16.mxu0 0
        %901 = vmatpush1.bf16.msra.mxu0 %v867
        %902 = vmatprep.subr.bf16.mxu0 0
        %903 = vmatpush1.bf16.msra.mxu0 %v868
        %904 = vmatprep.subr.bf16.mxu0 0
        %905 = vmatpush1.bf16.msra.mxu0 %v869
        %906 = vmatprep.subr.bf16.mxu0 0
        %907 = vmatpush1.bf16.msra.mxu0 0
        %908 = vmatprep.subr.bf16.mxu0 0
        %909 = vmatpush1.bf16.msra.mxu0 0
        %910 = vmatprep.subr.bf16.mxu0 0
        %911 = vmatpush1.bf16.msra.mxu0 0
        %912 = vmatprep.subr.bf16.mxu0 0
        %913 = vmatpush1.bf16.msra.mxu0 0
        %914 = vmatprep.subr.bf16.mxu0 0
        %915 = vmatpush1.bf16.msra.mxu0 0
        %916 = vmatprep.subr.bf16.mxu0 0
        %917 = vmatpush1.bf16.msra.mxu0 0
        %918 = vmatprep.subr.bf16.mxu0 0
        %919 = vmatpush1.bf16.msra.mxu0 0
        %920 = vmatprep.subr.bf16.mxu0 0
        %921 = vmatpush1.bf16.msra.mxu0 0
        %922 = vmatprep.subr.bf16.mxu0 0
        %923 = vmatpush1.bf16.msra.mxu0 0
        %924 = vmatprep.subr.bf16.mxu0 0
        %925 = vmatpush1.bf16.msra.mxu0 0
        %926 = vmatprep.subr.bf16.mxu0 0
        %927 = vmatpush1.bf16.msra.mxu0 0
        %928 = vmatprep.subr.bf16.mxu0 0
        %929 = vmatpush1.bf16.msra.mxu0 0
        %930 = vmatprep.mubr.bf16.mxu0 0
        %931 = vmatmul.mubr.bf16.gmra.mrb[0].mxu0 %v875
        %v932 = vpop.f32.mrb[0].mxu0
        %v933 = vadd.f32 %v848, %v932
        %v934 = vpop.f32.mrb[0].mxu0
        %v935 = vpop.f32.mrb[0].mxu0
        %v936 = vadd.f32 %v848, %v935
        %v937 = vpop.f32.mrb[0].mxu0
        %938 = vmatprep.mubr.bf16.mxu0 0
        %939 = vmatmul.mubr.bf16.gmra.mrb[0].mxu0 %v878
        %v940 = vpop.f32.mrb[0].mxu0
        %v941 = vadd.f32 %v848, %v940
        %v942 = vpop.f32.mrb[0].mxu0
        %v943 = vpop.f32.mrb[0].mxu0
        %v944 = vadd.f32 %v848, %v943
        %v945 = vpop.f32.mrb[0].mxu0
        %946 = vmatprep.mubr.bf16.mxu0 0
        %947 = vmatmul.mubr.bf16.gmra.mrb[0].mxu0 %v881
        %v948 = vpop.f32.mrb[0].mxu0
        %v949 = vadd.f32 %v848, %v948
        %v950 = vpop.f32.mrb[0].mxu0
        %v951 = vpop.f32.mrb[0].mxu0
        %v952 = vadd.f32 %v848, %v951
        %v953 = vpop.f32.mrb[0].mxu0
        %954 = vmatprep.mubr.bf16.mxu0 0
        %955 = vmatmul.mubr.bf16.gmra.mrb[0].mxu0 %v884
        %v956 = vpop.f32.mrb[0].mxu0
        %v957 = vadd.f32 %v848, %v956
        %v958 = vpop.f32.mrb[0].mxu0
        %v959 = vpop.f32.mrb[0].mxu0
        %v960 = vadd.f32 %v848, %v959
        %v961 = vpop.f32.mrb[0].mxu0
        %962 = vmatprep.mubr.bf16.mxu0 0
        %963 = vmatmul.mubr.bf16.gmra.mrb[0].mxu0 %v887
        %v964 = vpop.f32.mrb[0].mxu0
        %v965 = vadd.f32 %v848, %v964
        %v966 = vpop.f32.mrb[0].mxu0
        %v967 = vpop.f32.mrb[0].mxu0
        %v968 = vadd.f32 %v848, %v967
        %v969 = vpop.f32.mrb[0].mxu0
        %970 = vmatprep.mubr.bf16.mxu0 0
        %971 = vmatmul.mubr.bf16.gmra.mrb[0].mxu0 %v890
        %v972 = vpop.f32.mrb[0].mxu0
        %v973 = vadd.f32 %v848, %v972
        %v974 = vpop.f32.mrb[0].mxu0
        %v975 = vpop.f32.mrb[0].mxu0
        %v976 = vadd.f32 %v848, %v975
        %v977 = vpop.f32.mrb[0].mxu0
        %978 = vmatprep.mubr.bf16.mxu0 0
        %979 = vmatmul.mubr.bf16.gmra.mrb[0].mxu0 %v893
        %v980 = vpop.f32.mrb[0].mxu0
        %v981 = vadd.f32 %v848, %v980
        %v982 = vpop.f32.mrb[0].mxu0
        %v983 = vpop.f32.mrb[0].mxu0
        %v984 = vadd.f32 %v848, %v983
        %v985 = vpop.f32.mrb[0].mxu0
        %986 = vmatprep.mubr.bf16.mxu0 0
        %987 = vmatmul.mubr.bf16.gmra.mrb[0].mxu0 %v896
        %v988 = vpop.f32.mrb[0].mxu0
        %v989 = vadd.f32 %v848, %v988
        %v990 = vpop.f32.mrb[0].mxu0
        %v991 = vpop.f32.mrb[0].mxu0
        %v992 = vadd.f32 %v848, %v991
        %v993 = vpop.f32.mrb[0].mxu0
        %994 = vdwg.mxu0
        %v995 = vmax.f32 %v933, 0.0
        %v996 = vmax.f32 %v936, 0.0
        %v997 = vmax.f32 %v941, 0.0
        %v998 = vmax.f32 %v944, 0.0
        %v999 = vmax.f32 %v949, 0.0
        %v1000 = vmax.f32 %v952, 0.0
        %v1001 = vmax.f32 %v957, 0.0
        %v1002 = vmax.f32 %v960, 0.0
        %v1003 = vmax.f32 %v965, 0.0
        %v1004 = vmax.f32 %v968, 0.0
        %v1005 = vmax.f32 %v973, 0.0
        %v1006 = vmax.f32 %v976, 0.0
        %v1007 = vmax.f32 %v981, 0.0
        %v1008 = vmax.f32 %v984, 0.0
        %v1009 = vmax.f32 %v989, 0.0
        %v1010 = vmax.f32 %v992, 0.0
        %v1011 = vpack.c.bf16 %v996, %v995
        %v1012 = vpack.c.bf16 %v998, %v997
        %v1013 = vpack.c.bf16 %v1000, %v999
        %v1014 = vpack.c.bf16 %v1002, %v1001
        %v1015 = vpack.c.bf16 %v1004, %v1003
        %v1016 = vpack.c.bf16 %v1006, %v1005
        %v1017 = vpack.c.bf16 %v1008, %v1007
        %v1018 = vpack.c.bf16 %v1010, %v1009
        %v1019 = vld [vmem:[%s7] sm:$0xf]
        %v1020 = vld [vmem:[%s7 + $0x4] sm:$0xf]
        %v1021 = vld [vmem:[%s7 + $0x8] sm:$0xf]
        %v1022 = vld [vmem:[%s7 + $0xc] sm:$0xf]
        %v1023 = vld [vmem:[%s8] sm:$0x1]
        %v1025 = vlaneseq
        %v1026 = vshrl.u32 %v1025, 7
        %v1027 = vsub.s32 0, %v1026
        %v1028 = vrot.slane %v1023, %v1027
        %v1034 = vunpack.c.l.b16 %v1019
        %v1035 = vunpack.c.l.b16 %v1020
        %v1036 = vunpack.c.l.b16 %v1021
        %v1037 = vunpack.c.l.b16 %v1022
        %v1038 = vpack.c.b16 %v1035, %v1034
        %v1039 = vpack.c.b16 %v1037, %v1036
        %vm1042 = vcmask 261120
        %v1044 = vsel %vm1042, %v1011, 0
        %v1047 = vsel %vm1042, %v1012, 0
        %v1050 = vsel %vm1042, %v1013, 0
        %v1053 = vsel %vm1042, %v1014, 0
        %v1056 = vsel %vm1042, %v1015, 0
        %v1059 = vsel %vm1042, %v1016, 0
        %v1062 = vsel %vm1042, %v1017, 0
        %v1065 = vsel %vm1042, %v1018, 0
        %1067 = vmatprep.subr.bf16.mxu0 0
        %1068 = vmatpush1.bf16.msra.mxu0 %v1038
        %1069 = vmatprep.subr.bf16.mxu0 0
        %1070 = vmatpush1.bf16.msra.mxu0 %v1039
        %1071 = vmatprep.subr.bf16.mxu0 0
        %1072 = vmatpush1.bf16.msra.mxu0 0
        %1073 = vmatprep.subr.bf16.mxu0 0
        %1074 = vmatpush1.bf16.msra.mxu0 0
        %1075 = vmatprep.subr.bf16.mxu0 0
        %1076 = vmatpush1.bf16.msra.mxu0 0
        %1077 = vmatprep.subr.bf16.mxu0 0
        %1078 = vmatpush1.bf16.msra.mxu0 0
        %1079 = vmatprep.subr.bf16.mxu0 0
        %1080 = vmatpush1.bf16.msra.mxu0 0
        %1081 = vmatprep.subr.bf16.mxu0 0
        %1082 = vmatpush1.bf16.msra.mxu0 0
        %1083 = vmatprep.subr.bf16.mxu0 0
        %1084 = vmatpush1.bf16.msra.mxu0 0
        %1085 = vmatprep.subr.bf16.mxu0 0
        %1086 = vmatpush1.bf16.msra.mxu0 0
        %1087 = vmatprep.subr.bf16.mxu0 0
        %1088 = vmatpush1.bf16.msra.mxu0 0
        %1089 = vmatprep.subr.bf16.mxu0 0
        %1090 = vmatpush1.bf16.msra.mxu0 0
        %1091 = vmatprep.subr.bf16.mxu0 0
        %1092 = vmatpush1.bf16.msra.mxu0 0
        %1093 = vmatprep.subr.bf16.mxu0 0
        %1094 = vmatpush1.bf16.msra.mxu0 0
        %1095 = vmatprep.subr.bf16.mxu0 0
        %1096 = vmatpush1.bf16.msra.mxu0 0
        %1097 = vmatprep.subr.bf16.mxu0 0
        %1098 = vmatpush1.bf16.msra.mxu0 0
        %1099 = vmatprep.mubr.bf16.mxu0 0
        %1100 = vmatmul.mubr.bf16.gmra.mrb[0].mxu0 %v1044
        %v1101 = vpop.f32.mrb[0].mxu0
        %v1102 = vadd.f32 %v1028, %v1101
        %v1103 = vpop.f32.mrb[0].mxu0
        %v1104 = vpop.f32.mrb[0].mxu0
        %v1105 = vadd.f32 %v1028, %v1104
        %v1106 = vpop.f32.mrb[0].mxu0
        %1107 = vmatprep.mubr.bf16.mxu0 0
        %1108 = vmatmul.mubr.bf16.gmra.mrb[0].mxu0 %v1047
        %v1109 = vpop.f32.mrb[0].mxu0
        %v1110 = vadd.f32 %v1028, %v1109
        %v1111 = vpop.f32.mrb[0].mxu0
        %v1112 = vpop.f32.mrb[0].mxu0
        %v1113 = vadd.f32 %v1028, %v1112
        %v1114 = vpop.f32.mrb[0].mxu0
        %1115 = vmatprep.mubr.bf16.mxu0 0
        %1116 = vmatmul.mubr.bf16.gmra.mrb[0].mxu0 %v1050
        %v1117 = vpop.f32.mrb[0].mxu0
        %v1118 = vadd.f32 %v1028, %v1117
        %v1119 = vpop.f32.mrb[0].mxu0
        %v1120 = vpop.f32.mrb[0].mxu0
        %v1121 = vadd.f32 %v1028, %v1120
        %v1122 = vpop.f32.mrb[0].mxu0
        %1123 = vmatprep.mubr.bf16.mxu0 0
        %1124 = vmatmul.mubr.bf16.gmra.mrb[0].mxu0 %v1053
        %v1125 = vpop.f32.mrb[0].mxu0
        %v1126 = vadd.f32 %v1028, %v1125
        %v1127 = vpop.f32.mrb[0].mxu0
        %v1128 = vpop.f32.mrb[0].mxu0
        %v1129 = vadd.f32 %v1028, %v1128
        %v1130 = vpop.f32.mrb[0].mxu0
        %1131 = vmatprep.mubr.bf16.mxu0 0
        %1132 = vmatmul.mubr.bf16.gmra.mrb[0].mxu0 %v1056
        %v1133 = vpop.f32.mrb[0].mxu0
        %v1134 = vadd.f32 %v1028, %v1133
        %v1135 = vpop.f32.mrb[0].mxu0
        %v1136 = vpop.f32.mrb[0].mxu0
        %v1137 = vadd.f32 %v1028, %v1136
        %v1138 = vpop.f32.mrb[0].mxu0
        %1139 = vmatprep.mubr.bf16.mxu0 0
        %1140 = vmatmul.mubr.bf16.gmra.mrb[0].mxu0 %v1059
        %v1141 = vpop.f32.mrb[0].mxu0
        %v1142 = vadd.f32 %v1028, %v1141
        %v1143 = vpop.f32.mrb[0].mxu0
        %v1144 = vpop.f32.mrb[0].mxu0
        %v1145 = vadd.f32 %v1028, %v1144
        %v1146 = vpop.f32.mrb[0].mxu0
        %1147 = vmatprep.mubr.bf16.mxu0 0
        %1148 = vmatmul.mubr.bf16.gmra.mrb[0].mxu0 %v1062
        %v1149 = vpop.f32.mrb[0].mxu0
        %v1150 = vadd.f32 %v1028, %v1149
        %v1151 = vpop.f32.mrb[0].mxu0
        %v1152 = vpop.f32.mrb[0].mxu0
        %v1153 = vadd.f32 %v1028, %v1152
        %v1154 = vpop.f32.mrb[0].mxu0
        %1155 = vmatprep.mubr.bf16.mxu0 0
        %1156 = vmatmul.mubr.bf16.gmra.mrb[0].mxu0 %v1065
        %v1157 = vpop.f32.mrb[0].mxu0
        %v1158 = vadd.f32 %v1028, %v1157
        %v1159 = vpop.f32.mrb[0].mxu0
        %v1160 = vpop.f32.mrb[0].mxu0
        %v1161 = vadd.f32 %v1028, %v1160
        %v1162 = vpop.f32.mrb[0].mxu0
        %1163 = vdwg.mxu0
        %v1164 = vmax.f32 %v1102, 0.0
        %v1165 = vmax.f32 %v1105, 0.0
        %v1166 = vmax.f32 %v1110, 0.0
        %v1167 = vmax.f32 %v1113, 0.0
        %v1168 = vmax.f32 %v1118, 0.0
        %v1169 = vmax.f32 %v1121, 0.0
        %v1170 = vmax.f32 %v1126, 0.0
        %v1171 = vmax.f32 %v1129, 0.0
        %v1172 = vmax.f32 %v1134, 0.0
        %v1173 = vmax.f32 %v1137, 0.0
        %v1174 = vmax.f32 %v1142, 0.0
        %v1175 = vmax.f32 %v1145, 0.0
        %v1176 = vmax.f32 %v1150, 0.0
        %v1177 = vmax.f32 %v1153, 0.0
        %v1178 = vmax.f32 %v1158, 0.0
        %v1179 = vmax.f32 %v1161, 0.0
        %v1180 = vpack.c.bf16 %v1165, %v1164
        %v1181 = vpack.c.bf16 %v1167, %v1166
        %v1182 = vpack.c.bf16 %v1169, %v1168
        %v1183 = vpack.c.bf16 %v1171, %v1170
        %v1184 = vpack.c.bf16 %v1173, %v1172
        %v1185 = vpack.c.bf16 %v1175, %v1174
        %v1186 = vpack.c.bf16 %v1177, %v1176
        %v1187 = vpack.c.bf16 %v1179, %v1178
        %v1188 = vld [vmem:[%s9] sm:$0xf]
        %v1189 = vld [vmem:[%s9 + $0x4] sm:$0xf]
        %v1190 = vld [vmem:[%s10] sm:$0x1]
        %v1192 = vlaneseq
        %v1193 = vshrl.u32 %v1192, 7
        %v1194 = vsub.s32 0, %v1193
        %v1195 = vrot.slane %v1190, %v1194
        %v1199 = vunpack.c.l.b16 %v1188
        %v1200 = vunpack.c.l.b16 %v1189
        %v1201 = vpack.c.b16 %v1200, %v1199
        %vm1203 = vcmask 130048
        %v1205 = vsel %vm1203, %v1180, 0
        %v1208 = vsel %vm1203, %v1181, 0
        %v1211 = vsel %vm1203, %v1182, 0
        %v1214 = vsel %vm1203, %v1183, 0
        %v1217 = vsel %vm1203, %v1184, 0
        %v1220 = vsel %vm1203, %v1185, 0
        %v1223 = vsel %vm1203, %v1186, 0
        %v1226 = vsel %vm1203, %v1187, 0
        %1228 = vmatprep.subr.bf16.mxu0 0
        %1229 = vmatpush1.bf16.msra.mxu0 %v1201
        %1230 = vmatprep.subr.bf16.mxu0 0
        %1231 = vmatpush1.bf16.msra.mxu0 0
        %1232 = vmatprep.subr.bf16.mxu0 0
        %1233 = vmatpush1.bf16.msra.mxu0 0
        %1234 = vmatprep.subr.bf16.mxu0 0
        %1235 = vmatpush1.bf16.msra.mxu0 0
        %1236 = vmatprep.subr.bf16.mxu0 0
        %1237 = vmatpush1.bf16.msra.mxu0 0
        %1238 = vmatprep.subr.bf16.mxu0 0
        %1239 = vmatpush1.bf16.msra.mxu0 0
        %1240 = vmatprep.subr.bf16.mxu0 0
        %1241 = vmatpush1.bf16.msra.mxu0 0
        %1242 = vmatprep.subr.bf16.mxu0 0
        %1243 = vmatpush1.bf16.msra.mxu0 0
        %1244 = vmatprep.subr.bf16.mxu0 0
        %1245 = vmatpush1.bf16.msra.mxu0 0
        %1246 = vmatprep.subr.bf16.mxu0 0
        %1247 = vmatpush1.bf16.msra.mxu0 0
        %1248 = vmatprep.subr.bf16.mxu0 0
        %1249 = vmatpush1.bf16.msra.mxu0 0
        %1250 = vmatprep.subr.bf16.mxu0 0
        %1251 = vmatpush1.bf16.msra.mxu0 0
        %1252 = vmatprep.subr.bf16.mxu0 0
        %1253 = vmatpush1.bf16.msra.mxu0 0
        %1254 = vmatprep.subr.bf16.mxu0 0
        %1255 = vmatpush1.bf16.msra.mxu0 0
        %1256 = vmatprep.subr.bf16.mxu0 0
        %1257 = vmatpush1.bf16.msra.mxu0 0
        %1258 = vmatprep.subr.bf16.mxu0 0
        %1259 = vmatpush1.bf16.msra.mxu0 0
        %1260 = vmatprep.mubr.bf16.mxu0 0
        %1261 = vmatmul.mubr.bf16.gmra.mrb[0].mxu0 %v1205
        %v1262 = vpop.f32.mrb[0].mxu0
        %v1263 = vadd.f32 %v1195, %v1262
        %v1264 = vpop.f32.mrb[0].mxu0
        %v1265 = vpop.f32.mrb[0].mxu0
        %v1266 = vadd.f32 %v1195, %v1265
        %v1267 = vpop.f32.mrb[0].mxu0
        %1268 = vmatprep.mubr.bf16.mxu0 0
        %1269 = vmatmul.mubr.bf16.gmra.mrb[0].mxu0 %v1208
        %v1270 = vpop.f32.mrb[0].mxu0
        %v1271 = vadd.f32 %v1195, %v1270
        %v1272 = vpop.f32.mrb[0].mxu0
        %v1273 = vpop.f32.mrb[0].mxu0
        %v1274 = vadd.f32 %v1195, %v1273
        %v1275 = vpop.f32.mrb[0].mxu0
        %1276 = vmatprep.mubr.bf16.mxu0 0
        %1277 = vmatmul.mubr.bf16.gmra.mrb[0].mxu0 %v1211
        %v1278 = vpop.f32.mrb[0].mxu0
        %v1279 = vadd.f32 %v1195, %v1278
        %v1280 = vpop.f32.mrb[0].mxu0
        %v1281 = vpop.f32.mrb[0].mxu0
        %v1282 = vadd.f32 %v1195, %v1281
        %v1283 = vpop.f32.mrb[0].mxu0
        %1284 = vmatprep.mubr.bf16.mxu0 0
        %1285 = vmatmul.mubr.bf16.gmra.mrb[0].mxu0 %v1214
        %v1286 = vpop.f32.mrb[0].mxu0
        %v1287 = vadd.f32 %v1195, %v1286
        %v1288 = vpop.f32.mrb[0].mxu0
        %v1289 = vpop.f32.mrb[0].mxu0
        %v1290 = vadd.f32 %v1195, %v1289
        %v1291 = vpop.f32.mrb[0].mxu0
        %1292 = vmatprep.mubr.bf16.mxu0 0
        %1293 = vmatmul.mubr.bf16.gmra.mrb[0].mxu0 %v1217
        %v1294 = vpop.f32.mrb[0].mxu0
        %v1295 = vadd.f32 %v1195, %v1294
        %v1296 = vpop.f32.mrb[0].mxu0
        %v1297 = vpop.f32.mrb[0].mxu0
        %v1298 = vadd.f32 %v1195, %v1297
        %v1299 = vpop.f32.mrb[0].mxu0
        %1300 = vmatprep.mubr.bf16.mxu0 0
        %1301 = vmatmul.mubr.bf16.gmra.mrb[0].mxu0 %v1220
        %v1302 = vpop.f32.mrb[0].mxu0
        %v1303 = vadd.f32 %v1195, %v1302
        %v1304 = vpop.f32.mrb[0].mxu0
        %v1305 = vpop.f32.mrb[0].mxu0
        %v1306 = vadd.f32 %v1195, %v1305
        %v1307 = vpop.f32.mrb[0].mxu0
        %1308 = vmatprep.mubr.bf16.mxu0 0
        %1309 = vmatmul.mubr.bf16.gmra.mrb[0].mxu0 %v1223
        %v1310 = vpop.f32.mrb[0].mxu0
        %v1311 = vadd.f32 %v1195, %v1310
        %v1312 = vpop.f32.mrb[0].mxu0
        %v1313 = vpop.f32.mrb[0].mxu0
        %v1314 = vadd.f32 %v1195, %v1313
        %v1315 = vpop.f32.mrb[0].mxu0
        %1316 = vmatprep.mubr.bf16.mxu0 0
        %1317 = vmatmul.mubr.bf16.gmra.mrb[0].mxu0 %v1226
        %v1318 = vpop.f32.mrb[0].mxu0
        %v1319 = vadd.f32 %v1195, %v1318
        %v1320 = vpop.f32.mrb[0].mxu0
        %v1321 = vpop.f32.mrb[0].mxu0
        %v1322 = vadd.f32 %v1195, %v1321
        %v1323 = vpop.f32.mrb[0].mxu0
        %1324 = vdwg.mxu0
        %v1325 = vmax.f32 %v1263, 0.0
        %v1326 = vmax.f32 %v1266, 0.0
        %v1327 = vmax.f32 %v1271, 0.0
        %v1328 = vmax.f32 %v1274, 0.0
        %v1329 = vmax.f32 %v1279, 0.0
        %v1330 = vmax.f32 %v1282, 0.0
        %v1331 = vmax.f32 %v1287, 0.0
        %v1332 = vmax.f32 %v1290, 0.0
        %v1333 = vmax.f32 %v1295, 0.0
        %v1334 = vmax.f32 %v1298, 0.0
        %v1335 = vmax.f32 %v1303, 0.0
        %v1336 = vmax.f32 %v1306, 0.0
        %v1337 = vmax.f32 %v1311, 0.0
        %v1338 = vmax.f32 %v1314, 0.0
        %v1339 = vmax.f32 %v1319, 0.0
        %v1340 = vmax.f32 %v1322, 0.0
        %v1341 = vld [vmem:[%s11] sm:$0x1]
        %v1343 = vlaneseq
        %v1344 = vshrl.u32 %v1343, 7
        %v1345 = vsub.s32 0, %v1344
        %v1346 = vrot.slane %v1341, %v1345
        %v1348 = vmul.f32 %v578, %v1346
        %v1349 = vmul.f32 %v579, %v1346
        %v1350 = vmul.f32 %v580, %v1346
        %v1351 = vmul.f32 %v581, %v1346
        %v1352 = vmul.f32 %v582, %v1346
        %v1353 = vmul.f32 %v583, %v1346
        %v1354 = vmul.f32 %v584, %v1346
        %v1355 = vmul.f32 %v585, %v1346
        %v1356 = vmul.f32 %v586, %v1346
        %v1357 = vmul.f32 %v587, %v1346
        %v1358 = vmul.f32 %v588, %v1346
        %v1359 = vmul.f32 %v589, %v1346
        %v1360 = vmul.f32 %v590, %v1346
        %v1361 = vmul.f32 %v591, %v1346
        %v1362 = vmul.f32 %v592, %v1346
        %v1363 = vmul.f32 %v593, %v1346
        %v1364 = vsel %vm1042, %v1348, 0.0
        %1365 = vadd.xlane.f32.xlu0 %v1364
        %v1366 = vpop.xlane.xlu0 %1365
        %v1367 = vsel %vm1042, %v1349, 0.0
        %1368 = vadd.xlane.f32.xlu0 %v1367
        %v1369 = vpop.xlane.xlu0 %1368
        %v1370 = vsel %vm1042, %v1350, 0.0
        %1371 = vadd.xlane.f32.xlu0 %v1370
        %v1372 = vpop.xlane.xlu0 %1371
        %v1373 = vsel %vm1042, %v1351, 0.0
        %1374 = vadd.xlane.f32.xlu0 %v1373
        %v1375 = vpop.xlane.xlu0 %1374
        %v1376 = vsel %vm1042, %v1352, 0.0
        %1377 = vadd.xlane.f32.xlu0 %v1376
        %v1378 = vpop.xlane.xlu0 %1377
        %v1379 = vsel %vm1042, %v1353, 0.0
        %1380 = vadd.xlane.f32.xlu0 %v1379
        %v1381 = vpop.xlane.xlu0 %1380
        %v1382 = vsel %vm1042, %v1354, 0.0
        %1383 = vadd.xlane.f32.xlu0 %v1382
        %v1384 = vpop.xlane.xlu0 %1383
        %v1385 = vsel %vm1042, %v1355, 0.0
        %1386 = vadd.xlane.f32.xlu0 %v1385
        %v1387 = vpop.xlane.xlu0 %1386
        %v1388 = vsel %vm1042, %v1356, 0.0
        %1389 = vadd.xlane.f32.xlu0 %v1388
        %v1390 = vpop.xlane.xlu0 %1389
        %v1391 = vsel %vm1042, %v1357, 0.0
        %1392 = vadd.xlane.f32.xlu0 %v1391
        %v1393 = vpop.xlane.xlu0 %1392
        %v1394 = vsel %vm1042, %v1358, 0.0
        %1395 = vadd.xlane.f32.xlu0 %v1394
        %v1396 = vpop.xlane.xlu0 %1395
        %v1397 = vsel %vm1042, %v1359, 0.0
        %1398 = vadd.xlane.f32.xlu0 %v1397
        %v1399 = vpop.xlane.xlu0 %1398
        %v1400 = vsel %vm1042, %v1360, 0.0
        %1401 = vadd.xlane.f32.xlu0 %v1400
        %v1402 = vpop.xlane.xlu0 %1401
        %v1403 = vsel %vm1042, %v1361, 0.0
        %1404 = vadd.xlane.f32.xlu0 %v1403
        %v1405 = vpop.xlane.xlu0 %1404
        %v1406 = vsel %vm1042, %v1362, 0.0
        %1407 = vadd.xlane.f32.xlu0 %v1406
        %v1408 = vpop.xlane.xlu0 %1407
        %v1409 = vsel %vm1042, %v1363, 0.0
        %1410 = vadd.xlane.f32.xlu0 %v1409
        %v1411 = vpop.xlane.xlu0 %1410
        %v1412 = vld [vmem:[%s12] sm:$0x1]
        %v1414 = vlaneseq
        %v1415 = vshrl.u32 %v1414, 7
        %v1416 = vsub.s32 0, %v1415
        %v1417 = vrot.slane %v1412, %v1416
        %v1419 = vmul.f32 %v1325, %v1417
        %v1420 = vmul.f32 %v1326, %v1417
        %v1421 = vmul.f32 %v1327, %v1417
        %v1422 = vmul.f32 %v1328, %v1417
        %v1423 = vmul.f32 %v1329, %v1417
        %v1424 = vmul.f32 %v1330, %v1417
        %v1425 = vmul.f32 %v1331, %v1417
        %v1426 = vmul.f32 %v1332, %v1417
        %v1427 = vmul.f32 %v1333, %v1417
        %v1428 = vmul.f32 %v1334, %v1417
        %v1429 = vmul.f32 %v1335, %v1417
        %v1430 = vmul.f32 %v1336, %v1417
        %v1431 = vmul.f32 %v1337, %v1417
        %v1432 = vmul.f32 %v1338, %v1417
        %v1433 = vmul.f32 %v1339, %v1417
        %v1434 = vmul.f32 %v1340, %v1417
        %vm1435 = vcmask 64512
        %v1436 = vsel %vm1435, %v1419, 0.0
        %1437 = vadd.xlane.f32.xlu0 %v1436
        %v1438 = vpop.xlane.xlu0 %1437
        %v1439 = vsel %vm1435, %v1420, 0.0
        %1440 = vadd.xlane.f32.xlu0 %v1439
        %v1441 = vpop.xlane.xlu0 %1440
        %v1442 = vsel %vm1435, %v1421, 0.0
        %1443 = vadd.xlane.f32.xlu0 %v1442
        %v1444 = vpop.xlane.xlu0 %1443
        %v1445 = vsel %vm1435, %v1422, 0.0
        %1446 = vadd.xlane.f32.xlu0 %v1445
        %v1447 = vpop.xlane.xlu0 %1446
        %v1448 = vsel %vm1435, %v1423, 0.0
        %1449 = vadd.xlane.f32.xlu0 %v1448
        %v1450 = vpop.xlane.xlu0 %1449
        %v1451 = vsel %vm1435, %v1424, 0.0
        %1452 = vadd.xlane.f32.xlu0 %v1451
        %v1453 = vpop.xlane.xlu0 %1452
        %v1454 = vsel %vm1435, %v1425, 0.0
        %1455 = vadd.xlane.f32.xlu0 %v1454
        %v1456 = vpop.xlane.xlu0 %1455
        %v1457 = vsel %vm1435, %v1426, 0.0
        %1458 = vadd.xlane.f32.xlu0 %v1457
        %v1459 = vpop.xlane.xlu0 %1458
        %v1460 = vsel %vm1435, %v1427, 0.0
        %1461 = vadd.xlane.f32.xlu0 %v1460
        %v1462 = vpop.xlane.xlu0 %1461
        %v1463 = vsel %vm1435, %v1428, 0.0
        %1464 = vadd.xlane.f32.xlu0 %v1463
        %v1465 = vpop.xlane.xlu0 %1464
        %v1466 = vsel %vm1435, %v1429, 0.0
        %1467 = vadd.xlane.f32.xlu0 %v1466
        %v1468 = vpop.xlane.xlu0 %1467
        %v1469 = vsel %vm1435, %v1430, 0.0
        %1470 = vadd.xlane.f32.xlu0 %v1469
        %v1471 = vpop.xlane.xlu0 %1470
        %v1472 = vsel %vm1435, %v1431, 0.0
        %1473 = vadd.xlane.f32.xlu0 %v1472
        %v1474 = vpop.xlane.xlu0 %1473
        %v1475 = vsel %vm1435, %v1432, 0.0
        %1476 = vadd.xlane.f32.xlu0 %v1475
        %v1477 = vpop.xlane.xlu0 %1476
        %v1478 = vsel %vm1435, %v1433, 0.0
        %1479 = vadd.xlane.f32.xlu0 %v1478
        %v1480 = vpop.xlane.xlu0 %1479
        %v1481 = vsel %vm1435, %v1434, 0.0
        %1482 = vadd.xlane.f32.xlu0 %v1481
        %v1483 = vpop.xlane.xlu0 %1482
        %v1484 = vadd.f32 %v1366, %v1438
        %v1485 = vadd.f32 %v1369, %v1441
        %v1486 = vadd.f32 %v1372, %v1444
        %v1487 = vadd.f32 %v1375, %v1447
        %v1488 = vadd.f32 %v1378, %v1450
        %v1489 = vadd.f32 %v1381, %v1453
        %v1490 = vadd.f32 %v1384, %v1456
        %v1491 = vadd.f32 %v1387, %v1459
        %v1492 = vadd.f32 %v1390, %v1462
        %v1493 = vadd.f32 %v1393, %v1465
        %v1494 = vadd.f32 %v1396, %v1468
        %v1495 = vadd.f32 %v1399, %v1471
        %v1496 = vadd.f32 %v1402, %v1474
        %v1497 = vadd.f32 %v1405, %v1477
        %v1498 = vadd.f32 %v1408, %v1480
        %v1499 = vadd.f32 %v1411, %v1483
        %v1500 = vld [vmem:[#allocation2] sm:$0x1]
        %1502 = vset.pattern.permute.xlu0 0
        %1503 = vperm.xlu0 %1502, %v1500
        %v1504 = vpop.permute.xlu0 %1503
        %v1506 = vlaneseq
        %v1507 = vshrl.u32 %v1506, 7
        %v1508 = vsub.s32 0, %v1507
        %v1509 = vrot.slane %v1504, %v1508
        %v1510 = vadd.f32 %v1484, %v1509
        %v1511 = vadd.f32 %v1485, %v1509
        %v1512 = vadd.f32 %v1486, %v1509
        %v1513 = vadd.f32 %v1487, %v1509
        %v1514 = vadd.f32 %v1488, %v1509
        %v1515 = vadd.f32 %v1489, %v1509
        %v1516 = vadd.f32 %v1490, %v1509
        %v1517 = vadd.f32 %v1491, %v1509
        %v1518 = vadd.f32 %v1492, %v1509
        %v1519 = vadd.f32 %v1493, %v1509
        %v1520 = vadd.f32 %v1494, %v1509
        %v1521 = vadd.f32 %v1495, %v1509
        %v1522 = vadd.f32 %v1496, %v1509
        %v1523 = vadd.f32 %v1497, %v1509
        %v1524 = vadd.f32 %v1498, %v1509
        %v1525 = vadd.f32 %v1499, %v1509
        %v1542 = vlaneseq
        %v1543 = vand.u32 %v1542, 127
        %v1544 = vlaneseq
        %v1545 = vshrl.u32 %v1544, 7
        %v1546 = vsub.s32 %v1543, %v1545
        %v1547 = vrot.slane %v1510, %v1546
        %v1548 = vadd.s32 %v1543, 4294967288
        %v1549 = vlaneseq
        %v1550 = vshrl.u32 %v1549, 7
        %v1551 = vsub.s32 %v1548, %v1550
        %v1552 = vrot.slane %v1511, %v1551
        %vm1553 = vcmask 130112
        %v1554 = vsel %vm1553, %v1552, %v1547
        %v1555 = vadd.s32 %v1543, 4294967280
        %v1556 = vlaneseq
        %v1557 = vshrl.u32 %v1556, 7
        %v1558 = vsub.s32 %v1555, %v1557
        %v1559 = vrot.slane %v1512, %v1558
        %vm1560 = vcmask 195712
        %v1561 = vsel %vm1560, %v1559, %v1554
        %v1562 = vadd.s32 %v1543, 4294967272
        %v1563 = vlaneseq
        %v1564 = vshrl.u32 %v1563, 7
        %v1565 = vsub.s32 %v1562, %v1564
        %v1566 = vrot.slane %v1513, %v1565
        %vm1567 = vcmask 261312
        %v1568 = vsel %vm1567, %v1566, %v1561
        %v1569 = vadd.s32 %v1543, 4294967264
        %v1570 = vlaneseq
        %v1571 = vshrl.u32 %v1570, 7
        %v1572 = vsub.s32 %v1569, %v1571
        %v1573 = vrot.slane %v1514, %v1572
        %vm1574 = vcmask 326912
        %v1575 = vsel %vm1574, %v1573, %v1568
        %v1576 = vadd.s32 %v1543, 4294967256
        %v1577 = vlaneseq
        %v1578 = vshrl.u32 %v1577, 7
        %v1579 = vsub.s32 %v1576, %v1578
        %v1580 = vrot.slane %v1515, %v1579
        %vm1581 = vcmask 392512
        %v1582 = vsel %vm1581, %v1580, %v1575
        %v1583 = vadd.s32 %v1543, 4294967248
        %v1584 = vlaneseq
        %v1585 = vshrl.u32 %v1584, 7
        %v1586 = vsub.s32 %v1583, %v1585
        %v1587 = vrot.slane %v1516, %v1586
        %vm1588 = vcmask 458112
        %v1589 = vsel %vm1588, %v1587, %v1582
        %v1590 = vadd.s32 %v1543, 4294967240
        %v1591 = vlaneseq
        %v1592 = vshrl.u32 %v1591, 7
        %v1593 = vsub.s32 %v1590, %v1592
        %v1594 = vrot.slane %v1517, %v1593
        %vm1595 = vcmask 523712
        %v1596 = vsel %vm1595, %v1594, %v1589
        %v1597 = vadd.s32 %v1543, 4294967232
        %v1598 = vlaneseq
        %v1599 = vshrl.u32 %v1598, 7
        %v1600 = vsub.s32 %v1597, %v1599
        %v1601 = vrot.slane %v1518, %v1600
        %vm1602 = vcmask 589312
        %v1603 = vsel %vm1602, %v1601, %v1596
        %v1604 = vadd.s32 %v1543, 4294967224
        %v1605 = vlaneseq
        %v1606 = vshrl.u32 %v1605, 7
        %v1607 = vsub.s32 %v1604, %v1606
        %v1608 = vrot.slane %v1519, %v1607
        %vm1609 = vcmask 654912
        %v1610 = vsel %vm1609, %v1608, %v1603
        %v1611 = vadd.s32 %v1543, 4294967216
        %v1612 = vlaneseq
        %v1613 = vshrl.u32 %v1612, 7
        %v1614 = vsub.s32 %v1611, %v1613
        %v1615 = vrot.slane %v1520, %v1614
        %vm1616 = vcmask 720512
        %v1617 = vsel %vm1616, %v1615, %v1610
        %v1618 = vadd.s32 %v1543, 4294967208
        %v1619 = vlaneseq
        %v1620 = vshrl.u32 %v1619, 7
        %v1621 = vsub.s32 %v1618, %v1620
        %v1622 = vrot.slane %v1521, %v1621
        %vm1623 = vcmask 786112
        %v1624 = vsel %vm1623, %v1622, %v1617
        %v1625 = vadd.s32 %v1543, 4294967200
        %v1626 = vlaneseq
        %v1627 = vshrl.u32 %v1626, 7
        %v1628 = vsub.s32 %v1625, %v1627
        %v1629 = vrot.slane %v1522, %v1628
        %vm1630 = vcmask 851712
        %v1631 = vsel %vm1630, %v1629, %v1624
        %v1632 = vadd.s32 %v1543, 4294967192
        %v1633 = vlaneseq
        %v1634 = vshrl.u32 %v1633, 7
        %v1635 = vsub.s32 %v1632, %v1634
        %v1636 = vrot.slane %v1523, %v1635
        %vm1637 = vcmask 917312
        %v1638 = vsel %vm1637, %v1636, %v1631
        %v1639 = vadd.s32 %v1543, 4294967184
        %v1640 = vlaneseq
        %v1641 = vshrl.u32 %v1640, 7
        %v1642 = vsub.s32 %v1639, %v1641
        %v1643 = vrot.slane %v1524, %v1642
        %vm1644 = vcmask 982912
        %v1645 = vsel %vm1644, %v1643, %v1638
        %v1646 = vadd.s32 %v1543, 4294967176
        %v1647 = vlaneseq
        %v1648 = vshrl.u32 %v1647, 7
        %v1649 = vsub.s32 %v1646, %v1648
        %v1650 = vrot.slane %v1525, %v1649
        %vm1651 = vcmask 1048512
        %v1652 = vsel %vm1651, %v1650, %v1645
        %1654 = vst [vmem:[%s494] sm:$0x1] %v1652
        %s1655 = sand.u32 %s347, 1
        %s1656 = scalar_lea.sflag [#allocation4], %s1655
        %s1657 = sand.u32 %s347, 1
        %s1658 = scalar_lea.vmem [#allocation3], %s1657
        // Predicated region
        $region77: #{tpu_custom_call.1} parent=75 // pred_check
          %p1659 = pneg %p357
        $region78: #{tpu_custom_call.1} parent=75 // pred_check_branch
          %1661 = sbr.rel (%p1659) target = $region80
        $region79: #{tpu_custom_call.1} parent=75 // pred_region
          %s1663 = ssub.s32 16, 16
          %1664 = vsyncadd %s1656, %s1663
          %s1665 = smul.addr %s30, 16
          %s1666 = scalar_lea.hbm %s14, %s1665
          %s1668 = sshll.u32 %s1658, 4
          %s1669 = int_to_ptr.vmem [resolvable:$true] %s1668
          %1671 = dma.vmem_to_hbm [thread:$0]  %s1669, 16, %s1666, %s1656
        $region80: #{tpu_custom_call.1} parent=75 // pred_fallthru
          _
      $region76: #{tpu_custom_call.1} parent=5 // pred_fallthru
        _
      %p1672 = scmp.le.s32.totalorder 2, %s25
      // Predicated region
      $region81: #{tpu_custom_call.1} parent=5 // pred_check
        %p1673 = pneg %p1672
      $region82: #{tpu_custom_call.1} parent=5 // pred_check_branch
        %1675 = sbr.rel (%p1673) target = $region84
      $region83: #{tpu_custom_call.1} parent=5 // pred_region
        %s1676 = ssub.s32 %s25, 2
        // Predicated region
        $region85: #{tpu_custom_call.1} parent=83 // pred_check
          %p1677 = pneg %p363
        $region86: #{tpu_custom_call.1} parent=83 // pred_check_branch
          %1679 = sbr.rel (%p1677) target = $region88
        $region87: #{tpu_custom_call.1} parent=83 // pred_region
          %s1680 = sand.u32 %s348, 1
          %s1681 = scalar_lea.sflag [#allocation4], %s1680
          %s1682 = sand.u32 %s348, 1
          %s1683 = scalar_lea.vmem [#allocation3], %s1682
          %1684 = dma.done %s1681, 16
        $region88: #{tpu_custom_call.1} parent=83 // pred_fallthru
          _
      $region84: #{tpu_custom_call.1} parent=5 // pred_fallthru
        _
    $region6: #{tpu_custom_call.1} parent=1 // loop_footer
      %s29 = sadd.s32 1, %s25
    $region7: #{tpu_custom_call.1} parent=1 // loop_footer_branch
      %24 = sbr.rel target = $region3
    $region8: #{tpu_custom_call.1} parent=1 // loop_exit
      _
    %1685 = vsyncpa [#allocation4], 1
    %s1686 = scalar_lea.sflag [#allocation4], 1
    %1687 = vsyncpa %s1686, 1

</llo_original>
